<compile_context>
chip_gen: v7x
topology: tpu7x:2x2x1
jax: 0.10.0
libtpu: 0.0.40
codegen_flags: <defaults>
</compile_context>

<pallas_src>
import jax
import jax.numpy as jnp
from jax.experimental import pallas as pl
from jax.experimental.pallas import tpu as pltpu


def _round_up(x, m):
    return (x + m - 1) // m * m


def _leaky_relu(x, slope=0.2):
    return jnp.where(x > 0, x, slope * x)


def discriminator_kernel(x_ref, w1_ref, b1_ref, w2_ref, b2_ref, w3_ref, b3_ref,
                         o_ref):
    # x_ref : (TB, K_pad) f32  (cast to bf16 in-kernel)
    # w1    : (K_pad, 512) bf16    b1: (1, 512) f32
    # w2    : (512, 256)   bf16    b2: (1, 256) f32
    # w3    : (1, 256)     f32     b3: (1, 1)   f32
    # o_ref : (TB, 1)      f32
    x = x_ref[...].astype(jnp.bfloat16)

    # Linear 1 + LeakyReLU(0.2): bf16 MXU matmul, f32 accumulation.
    h1 = jnp.dot(x, w1_ref[...], preferred_element_type=jnp.float32)
    h1 = _leaky_relu(h1 + b1_ref[...])

    # Linear 2 + LeakyReLU(0.2)
    h2 = jnp.dot(h1.astype(jnp.bfloat16), w2_ref[...],
                 preferred_element_type=jnp.float32)
    h2 = _leaky_relu(h2 + b2_ref[...])

    # Linear 3 (256 -> 1): VPU multiply + cross-lane (XLU) reduction; no padded
    # MXU issue and no (256, 128) weight DMA.
    h3 = jnp.sum(h2 * w3_ref[...], axis=-1, keepdims=True) + b3_ref[...]

    # Sigmoid via EUP: exp + approx reciprocal.
    o_ref[...] = pl.reciprocal(1.0 + jnp.exp(-h3), approx=True).astype(o_ref.dtype)


def _vmem_estimate(tb, k_pad):
    """Rough VMEM footprint (bytes): pipeline buffers + resident weights + temps."""
    # Assume the pipeline double-buffers every input spec (conservative for the
    # constant-index weight specs).
    w_bytes = 2 * (k_pad * 512 * 2 + 512 * 256 * 2 + (512 + 256 + 256 + 1) * 4)
    x_bytes = 2 * tb * k_pad * 4          # double-buffered f32 activation tile
    out_bytes = 2 * tb * 128 * 4          # (tb, 1) output, lane-padded
    tmp_bytes = tb * (k_pad * 2 + 512 * 4 + 512 * 2 + 256 * 4)  # bf16 x, h1 f32/bf16, h2 f32
    return w_bytes + x_bytes + out_bytes + tmp_bytes


def discriminator_forward(img, params):
    """img: (N, C, H, W) float32.  Returns validity (N, 1) float32."""
    n = img.shape[0]
    img_flat = img.reshape(n, -1).astype(jnp.float32)   # keep f32; cast in-kernel
    img_area = img_flat.shape[1]

    w1, b1, w2, b2, w3, b3 = params

    # Lane-align the contraction dimension (K): zero-pad img_area and w1 rows to
    # a multiple of 128. Zero padding leaves the matmul result unchanged.
    k_pad = _round_up(img_area, 128)
    if k_pad != img_area:
        img_flat = jnp.pad(img_flat, ((0, 0), (0, k_pad - img_area)))
        w1 = jnp.pad(w1, ((0, k_pad - img_area), (0, 0)))

    w1_bf = w1.astype(jnp.bfloat16)
    w2_bf = w2.astype(jnp.bfloat16)
    w3_row = w3.reshape(1, 256).astype(jnp.float32)      # (256, 1) -> (1, 256)
    b3_s = b3.reshape(1, 1).astype(jnp.float32)

    # Batch tile: multiple of 8, cap 512 to amortize per-grid-step overhead.
    n8 = _round_up(n, 8)
    tb = min(512, n8)
    if n8 >= 16:
        # Keep >= 2 grid steps so the "parallel" batch axis can shard across the
        # two v7x TensorCores.
        tb = min(tb, _round_up(n8 // 2, 8))
    # Shrink the tile if the footprint would blow the smallest scoped-VMEM budget.
    VMEM_BUDGET = 28 * 1024 * 1024
    while tb > 8 and _vmem_estimate(tb, k_pad) > VMEM_BUDGET:
        tb = max(8, _round_up(tb // 2, 8))

    n_pad = _round_up(n, tb)
    if n_pad != n:
        img_flat = jnp.pad(img_flat, ((0, n_pad - n), (0, 0)))
    num_tiles = n_pad // tb

    est = _vmem_estimate(tb, k_pad)
    vmem_limit = int(min(56 * 1024 * 1024, max(32 * 1024 * 1024, 2 * est)))

    flops = 2 * n_pad * (k_pad * 512 + 512 * 256 + 256)
    bytes_accessed = (n_pad * k_pad * 4                       # x (f32)
                      + k_pad * 512 * 2 + 512 * 256 * 2       # w1, w2 (bf16)
                      + (512 + 256 + 256 + 1) * 4             # biases + w3 row
                      + n_pad * 4)                            # output
    cost = pl.CostEstimate(flops=int(flops), transcendentals=int(2 * n_pad),
                           bytes_accessed=int(bytes_accessed))

    out = pl.pallas_call(
        discriminator_kernel,
        out_shape=jax.ShapeDtypeStruct((n_pad, 1), jnp.float32),
        grid=(num_tiles,),
        in_specs=[
            pl.BlockSpec((tb, k_pad), lambda i: (i, 0)),     # x tile, pipelined
            pl.BlockSpec((k_pad, 512), lambda i: (0, 0)),    # weights stay
            pl.BlockSpec((1, 512), lambda i: (0, 0)),        # resident in VMEM
            pl.BlockSpec((512, 256), lambda i: (0, 0)),
            pl.BlockSpec((1, 256), lambda i: (0, 0)),
            pl.BlockSpec((1, 256), lambda i: (0, 0)),
            pl.BlockSpec((1, 1), lambda i: (0, 0)),
        ],
        out_specs=pl.BlockSpec((tb, 1), lambda i: (i, 0)),
        compiler_params=pltpu.CompilerParams(
            dimension_semantics=("parallel",),
            vmem_limit_bytes=vmem_limit),
        cost_estimate=cost,
    )(img_flat, w1_bf, b1, w2_bf, b2, w3_row, b3_s)

    return out[:n]                                            # (N, 1)


def init_params(key, img_area):
    """Deterministic init mirroring nn.Linear default (uniform ±1/sqrt(fan_in))."""
    ks = jax.random.split(key, 6)

    def lin(kw, kb, fan_in, fan_out):
        bound = 1.0 / jnp.sqrt(fan_in)
        w = jax.random.uniform(kw, (fan_in, fan_out), jnp.float32, -bound, bound)
        b = jax.random.uniform(kb, (1, fan_out), jnp.float32, -bound, bound)
        return w, b

    w1, b1 = lin(ks[0], ks[1], img_area, 512)
    w2, b2 = lin(ks[2], ks[3], 512, 256)
    w3, b3 = lin(ks[4], ks[5], 256, 1)
    return (w1, b1, w2, b2, w3, b3)


def reference_forward(img, params):
    """Plain-JAX f32 reference for correctness checking."""
    w1, b1, w2, b2, w3, b3 = params
    x = img.reshape(img.shape[0], -1)
    h = x @ w1 + b1
    h = jnp.where(h > 0, h, 0.2 * h)
    h = h @ w2 + b2
    h = jnp.where(h > 0, h, 0.2 * h)
    return jax.nn.sigmoid(h @ w3 + b3)


if __name__ == "__main__":
    key = jax.random.PRNGKey(0)
    k_img, k_par = jax.random.split(key)

    # batch=10, channels=1, 20x20 -> img_area = 400 (exercises both the K padding
    # to 512 lanes and the batch padding / 2-tile grid paths).
    img = jax.random.normal(k_img, (10, 1, 20, 20), jnp.float32)
    params = init_params(k_par, 1 * 20 * 20)

    out = discriminator_forward(img, params)
    out = jax.block_until_ready(out)

    ref = reference_forward(img, params)
    assert out.shape == (10, 1), out.shape
    # bf16 matmul operands (f32 accumulation) + approx reciprocal -> loose tolerance.
    assert jnp.allclose(out, ref, atol=2e-2, rtol=2e-2), (out, ref)

    print("KERNEL_OK")
</pallas_src>

<mosaic_0001>
module attributes {stable_mosaic.version = 11 : i64} {
  func.func @discriminator_kernel(%arg0: i32, %arg1: memref<8x512xf32, #tpu.memory_space<vmem>>, %arg2: memref<512x512xbf16, #tpu.memory_space<vmem>>, %arg3: memref<1x512xf32, #tpu.memory_space<vmem>>, %arg4: memref<512x256xbf16, #tpu.memory_space<vmem>>, %arg5: memref<1x256xf32, #tpu.memory_space<vmem>>, %arg6: memref<1x256xf32, #tpu.memory_space<vmem>>, %arg7: memref<1x1xf32, #tpu.memory_space<vmem>>, %arg8: memref<8x1xf32, #tpu.memory_space<vmem>>) attributes {dimension_semantics = [#tpu.dimension_semantics<parallel>], iteration_bounds = array<i64: 2>, scalar_prefetch = 0 : i64, scratch_operands = 0 : i64, tpu.core_type = #tpu.core_type<tc>, window_params = [{transform_indices = @transform_0, window_bounds = array<i64: 8, 512>}, {pipeline_mode = #tpu.pipeline_mode<synchronous>, transform_indices = @transform_1, window_bounds = array<i64: 512, 512>}, {pipeline_mode = #tpu.pipeline_mode<synchronous>, transform_indices = @transform_2, window_bounds = array<i64: 1, 512>}, {pipeline_mode = #tpu.pipeline_mode<synchronous>, transform_indices = @transform_3, window_bounds = array<i64: 512, 256>}, {pipeline_mode = #tpu.pipeline_mode<synchronous>, transform_indices = @transform_4, window_bounds = array<i64: 1, 256>}, {pipeline_mode = #tpu.pipeline_mode<synchronous>, transform_indices = @transform_5, window_bounds = array<i64: 1, 256>}, {pipeline_mode = #tpu.pipeline_mode<synchronous>, transform_indices = @transform_6, window_bounds = array<i64: 1, 1>}, {transform_indices = @transform_7, window_bounds = array<i64: 8, 1>}]} {
    %c0 = arith.constant 0 : index
    %c0_0 = arith.constant 0 : index
    %0 = vector.load %arg1[%c0, %c0_0] : memref<8x512xf32, #tpu.memory_space<vmem>>, vector<8x512xf32>
    %1 = arith.truncf %0 : vector<8x512xf32> to vector<8x512xbf16>
    %c0_1 = arith.constant 0 : index
    %c0_2 = arith.constant 0 : index
    %2 = vector.load %arg2[%c0_1, %c0_2] : memref<512x512xbf16, #tpu.memory_space<vmem>>, vector<512x512xbf16>
    %cst = arith.constant dense<0.000000e+00> : vector<8x512xf32>
    %3 = tpu.matmul %1, %2, %cst {dimension_numbers = #tpu.dot_dimension_numbers<[1], [0], [0], [1], [0, 0, 1, 1], [], []>} : vector<8x512xbf16>, vector<512x512xbf16>, vector<8x512xf32> -> vector<8x512xf32>
    %c0_3 = arith.constant 0 : index
    %c0_4 = arith.constant 0 : index
    %4 = vector.load %arg3[%c0_3, %c0_4] : memref<1x512xf32, #tpu.memory_space<vmem>>, vector<1x512xf32>
    %5 = vector.broadcast %4 : vector<1x512xf32> to vector<8x512xf32>
    %6 = arith.addf %3, %5 : vector<8x512xf32>
    %cst_5 = arith.constant 0.000000e+00 : f32
    %7 = vector.broadcast %cst_5 : f32 to vector<8x512xf32>
    %8 = arith.cmpf ogt, %6, %7 : vector<8x512xf32>
    %cst_6 = arith.constant 2.000000e-01 : f32
    %9 = vector.broadcast %cst_6 : f32 to vector<8x512xf32>
    %10 = arith.mulf %9, %6 : vector<8x512xf32>
    %11 = arith.select %8, %6, %10 : vector<8x512xi1>, vector<8x512xf32>
    %12 = arith.truncf %11 : vector<8x512xf32> to vector<8x512xbf16>
    %c0_7 = arith.constant 0 : index
    %c0_8 = arith.constant 0 : index
    %13 = vector.load %arg4[%c0_7, %c0_8] : memref<512x256xbf16, #tpu.memory_space<vmem>>, vector<512x256xbf16>
    %cst_9 = arith.constant dense<0.000000e+00> : vector<8x256xf32>
    %14 = tpu.matmul %12, %13, %cst_9 {dimension_numbers = #tpu.dot_dimension_numbers<[1], [0], [0], [1], [0, 0, 1, 1], [], []>} : vector<8x512xbf16>, vector<512x256xbf16>, vector<8x256xf32> -> vector<8x256xf32>
    %c0_10 = arith.constant 0 : index
    %c0_11 = arith.constant 0 : index
    %15 = vector.load %arg5[%c0_10, %c0_11] : memref<1x256xf32, #tpu.memory_space<vmem>>, vector<1x256xf32>
    %16 = vector.broadcast %15 : vector<1x256xf32> to vector<8x256xf32>
    %17 = arith.addf %14, %16 : vector<8x256xf32>
    %cst_12 = arith.constant 0.000000e+00 : f32
    %18 = vector.broadcast %cst_12 : f32 to vector<8x256xf32>
    %19 = arith.cmpf ogt, %17, %18 : vector<8x256xf32>
    %cst_13 = arith.constant 2.000000e-01 : f32
    %20 = vector.broadcast %cst_13 : f32 to vector<8x256xf32>
    %21 = arith.mulf %20, %17 : vector<8x256xf32>
    %22 = arith.select %19, %17, %21 : vector<8x256xi1>, vector<8x256xf32>
    %c0_14 = arith.constant 0 : index
    %c0_15 = arith.constant 0 : index
    %23 = vector.load %arg6[%c0_14, %c0_15] : memref<1x256xf32, #tpu.memory_space<vmem>>, vector<1x256xf32>
    %24 = vector.broadcast %23 : vector<1x256xf32> to vector<8x256xf32>
    %25 = arith.mulf %22, %24 : vector<8x256xf32>
    %cst_16 = arith.constant dense<0.000000e+00> : vector<8xf32>
    %26 = vector.multi_reduction <add>, %25, %cst_16 [1] : vector<8x256xf32> to vector<8xf32>
    %27 = vector.shape_cast %26 : vector<8xf32> to vector<8x1xf32>
    %c0_17 = arith.constant 0 : index
    %c0_18 = arith.constant 0 : index
    %28 = vector.load %arg7[%c0_17, %c0_18] : memref<1x1xf32, #tpu.memory_space<vmem>>, vector<1x1xf32>
    %29 = vector.broadcast %28 : vector<1x1xf32> to vector<8x1xf32>
    %30 = arith.addf %27, %29 : vector<8x1xf32>
    %cst_19 = arith.constant 0.000000e+00 : f32
    %31 = vector.broadcast %cst_19 : f32 to vector<8x1xf32>
    %32 = arith.subf %31, %30 : vector<8x1xf32>
    %33 = math.exp %32 : vector<8x1xf32>
    %cst_20 = arith.constant 1.000000e+00 : f32
    %34 = vector.broadcast %cst_20 : f32 to vector<8x1xf32>
    %35 = arith.addf %34, %33 : vector<8x1xf32>
    %36 = tpu.reciprocal %35 {approx = true} : vector<8x1xf32> -> vector<8x1xf32>
    %c0_21 = arith.constant 0 : index
    %c0_22 = arith.constant 0 : index
    %37 = vector.load %arg8[%c0_21, %c0_22] : memref<8x1xf32, #tpu.memory_space<vmem>>, vector<8x1xf32>
    tpu.vector_store %arg8[%c0_21, %c0_22], %36 {strides = array<i32>} : memref<8x1xf32, #tpu.memory_space<vmem>>, vector<8x1xf32>,
    return
  }
  func.func @transform_0(%arg0: i32) -> (i32, i32) {
    %c0_i32 = arith.constant 0 : i32
    %c0_i32_0 = arith.constant 0 : i32
    return %arg0, %c0_i32 : i32, i32
  }
  func.func @transform_1(%arg0: i32) -> (i32, i32) {
    %c0_i32 = arith.constant 0 : i32
    %c0_i32_0 = arith.constant 0 : i32
    %c0_i32_1 = arith.constant 0 : i32
    return %c0_i32, %c0_i32_0 : i32, i32
  }
  func.func @transform_2(%arg0: i32) -> (i32, i32) {
    %c0_i32 = arith.constant 0 : i32
    %c0_i32_0 = arith.constant 0 : i32
    %c0_i32_1 = arith.constant 0 : i32
    return %c0_i32, %c0_i32_0 : i32, i32
  }
  func.func @transform_3(%arg0: i32) -> (i32, i32) {
    %c0_i32 = arith.constant 0 : i32
    %c0_i32_0 = arith.constant 0 : i32
    %c0_i32_1 = arith.constant 0 : i32
    return %c0_i32, %c0_i32_0 : i32, i32
  }
  func.func @transform_4(%arg0: i32) -> (i32, i32) {
    %c0_i32 = arith.constant 0 : i32
    %c0_i32_0 = arith.constant 0 : i32
    %c0_i32_1 = arith.constant 0 : i32
    return %c0_i32, %c0_i32_0 : i32, i32
  }
  func.func @transform_5(%arg0: i32) -> (i32, i32) {
    %c0_i32 = arith.constant 0 : i32
    %c0_i32_0 = arith.constant 0 : i32
    %c0_i32_1 = arith.constant 0 : i32
    return %c0_i32, %c0_i32_0 : i32, i32
  }
  func.func @transform_6(%arg0: i32) -> (i32, i32) {
    %c0_i32 = arith.constant 0 : i32
    %c0_i32_0 = arith.constant 0 : i32
    %c0_i32_1 = arith.constant 0 : i32
    return %c0_i32, %c0_i32_0 : i32, i32
  }
  func.func @transform_7(%arg0: i32) -> (i32, i32) {
    %c0_i32 = arith.constant 0 : i32
    %c0_i32_0 = arith.constant 0 : i32
    return %arg0, %c0_i32 : i32, i32
  }
}

</mosaic_0001>

<llo_original>
// kernel: tpu_custom_call.1
$region0: #{tpu_custom_call.1}
  #allocation0 [shape = 'u32[]', space=smem, size = 0x4, offset = 0x4, fixed_abs, tag = 'smem constant byte address 0x4 - core index']
  #allocation1 [shape = 'u32[144,128]{1,0:T(1,128)}', space=vmem, size = 0x12000, scoped, tag = 'internal scratch']
  #allocation2 [shape = 'f32[1,1]{1,0:T(1,128)S(1)}', space=vmem, size = 0x200, scoped, tag = 'scoped memory for tpu_custom_call.1']
  %s0 = inlined_call_operand.hbm [shape: f32[16,512], index: 0, kind: input, shape index: {}]
  %s1 = inlined_call_operand.hbm [shape: bf16[512,512], index: 1, kind: input, shape index: {}]
  %s2 = inlined_call_operand.vmem [shape: f32[1,512], index: 2, kind: input, shape index: {}]
  %s3 = inlined_call_operand.hbm [shape: bf16[512,256], index: 3, kind: input, shape index: {}]
  %s4 = inlined_call_operand.vmem [shape: f32[1,256], index: 4, kind: input, shape index: {}]
  %s5 = inlined_call_operand.vmem [shape: f32[1,256], index: 5, kind: input, shape index: {}]
  %s6 = inlined_call_operand.<no memory space> [shape: f32[1,1], index: 6, kind: input, shape index: {}]
  %s7 = inlined_call_operand.vmem [shape: f32[16,1], index: 7, kind: output, shape index: {}]
  %s8 = sld [smem:[#allocation0]]
  $region73: #{tpu_custom_call.1} parent=0
    _
  %s10 = ssub.s32 1, %s8
  %s11 = scalar_select 0, %s10, %s8
  %v12 = vstv %s6
  %13 = vst [vmem:[#allocation2] sm:$0x1] %v12
  $region1: #{tpu_custom_call.1} parent=0
    #allocation3 [shape = 'u8[32768]{0}', space=vmem, size = 0x8000, scoped, tag = 'input window, operand 0']
    #allocation4 [shape = 's32[2]{0}', space=sflag, size = 0x8, scoped, tag = 'scoped memory for tpu_custom_call.1']
    #allocation5 [shape = 'u8[524288]{0}', space=vmem, size = 0x80000, scoped, tag = 'input window, operand 1, single buffered']
    #allocation6 [shape = 's32[1]{0}', space=sflag, size = 0x4, scoped, tag = 'scoped memory for tpu_custom_call.1']
    #allocation7 [shape = 'u8[262144]{0}', space=vmem, size = 0x40000, scoped, tag = 'input window, operand 3, single buffered']
    %14 = vsyncpa [#allocation4], 0
    %s15 = scalar_lea.sflag [#allocation4], 1
    %16 = vsyncpa %s15, 0
    %17 = vsyncpa [#allocation6], 0
    loop: start=0, step=1, limit=4
    $region2: #{tpu_custom_call.1} parent=1 // loop_pre_header
      _
    $region3: #{tpu_custom_call.1} parent=1 // loop_header
      %s19 = sphi 0, %s23
      %p20 = scmp.ge.s32.totalorder %s19, 4
      %s29 = sphi 0, %s31
      %s32 = sphi 0, %s29
      %s33 = sphi 0, %s32
      %s49 = sphi 0, %s33
      %s53 = sphi 0, %s53
      %s55 = sphi 0, %s53
      %s56 = sphi 0, %s55
      %s70 = sphi 0, %s56
      %s74 = sphi 0, %s74
      %s76 = sphi 0, %s74
      %s77 = sphi 0, %s76
      %s91 = sphi 0, %s77
      %s95 = sphi 0, %s95
      %s97 = sphi 0, %s95
      %s98 = sphi 0, %s97
      %s112 = sphi 0, %s98
      %s116 = sphi 0, %s116
      %s118 = sphi 0, %s116
      %s119 = sphi 0, %s118
      %s133 = sphi 0, %s119
      %s137 = sphi 0, %s137
      %s139 = sphi 0, %s137
      %s140 = sphi 0, %s139
      %s154 = sphi 0, %s140
      %s158 = sphi 0, %s158
      %s160 = sphi 0, %s158
      %s161 = sphi 0, %s160
      %s175 = sphi 0, %s161
      %s181 = sphi 0, %s183
      %s184 = sphi 0, %s181
      %s185 = sphi 0, %s184
      %s201 = sphi 0, %s185
    $region4: #{tpu_custom_call.1} parent=1 // loop_header_branch
      %22 = sbr.rel (%p20) target = $region8
    $region5: #{tpu_custom_call.1} parent=1 // loop_body
      %s24 = ssub.s32 %s19, 1
      %s25 = ssub.s32 %s19, 2
      %s26 = sadd.s32 %s19, 1
      %s27 = ssub.s32 %s19, %s26
      %p28 = scmp.eq.s32.totalorder %s27, 0
      %s30 = sadd.s32 %s29, 1
      %s31 = scalar_select %p28, %s29, %s30
      %p34 = pneg %p28
      %p35 = scmp.eq.s32.totalorder %s19, 1
      %p36 = por %p34, %p35
      %p37 = scmp.ne.s32.totalorder %s29, %s32
      %p38 = scmp.eq.s32.totalorder %s19, 0
      %p39 = por %p37, %p38
      %p40 = scmp.ne.s32.totalorder %s29, %s32
      %p41 = scmp.eq.s32.totalorder %s24, 1
      %p42 = por %p40, %p41
      %p43 = scmp.ne.s32.totalorder %s32, %s33
      %p44 = scmp.eq.s32.totalorder %s24, 0
      %p45 = por %p43, %p44
      %p46 = scmp.ne.s32.totalorder %s32, %s33
      %p47 = scmp.eq.s32.totalorder %s25, 1
      %p48 = por %p46, %p47
      %p50 = scmp.ne.s32.totalorder %s33, %s49
      %p51 = scmp.eq.s32.totalorder %s25, 0
      %p52 = por %p50, %p51
      %s54 = sadd.s32 %s53, 1
      %p57 = scmp.eq.s32.totalorder %s19, 1
      %p58 = scmp.ne.s32.totalorder %s53, %s55
      %p59 = scmp.eq.s32.totalorder %s19, 0
      %p60 = por %p58, %p59
      %p61 = scmp.ne.s32.totalorder %s53, %s55
      %p62 = scmp.eq.s32.totalorder %s24, 1
      %p63 = por %p61, %p62
      %p64 = scmp.ne.s32.totalorder %s55, %s56
      %p65 = scmp.eq.s32.totalorder %s24, 0
      %p66 = por %p64, %p65
      %p67 = scmp.ne.s32.totalorder %s55, %s56
      %p68 = scmp.eq.s32.totalorder %s25, 1
      %p69 = por %p67, %p68
      %p71 = scmp.ne.s32.totalorder %s56, %s70
      %p72 = scmp.eq.s32.totalorder %s25, 0
      %p73 = por %p71, %p72
      %s75 = sadd.s32 %s74, 1
      %p78 = scmp.eq.s32.totalorder %s19, 1
      %p79 = scmp.ne.s32.totalorder %s74, %s76
      %p80 = scmp.eq.s32.totalorder %s19, 0
      %p81 = por %p79, %p80
      %p82 = scmp.ne.s32.totalorder %s74, %s76
      %p83 = scmp.eq.s32.totalorder %s24, 1
      %p84 = por %p82, %p83
      %p85 = scmp.ne.s32.totalorder %s76, %s77
      %p86 = scmp.eq.s32.totalorder %s24, 0
      %p87 = por %p85, %p86
      %p88 = scmp.ne.s32.totalorder %s76, %s77
      %p89 = scmp.eq.s32.totalorder %s25, 1
      %p90 = por %p88, %p89
      %p92 = scmp.ne.s32.totalorder %s77, %s91
      %p93 = scmp.eq.s32.totalorder %s25, 0
      %p94 = por %p92, %p93
      %s96 = sadd.s32 %s95, 1
      %p99 = scmp.eq.s32.totalorder %s19, 1
      %p100 = scmp.ne.s32.totalorder %s95, %s97
      %p101 = scmp.eq.s32.totalorder %s19, 0
      %p102 = por %p100, %p101
      %p103 = scmp.ne.s32.totalorder %s95, %s97
      %p104 = scmp.eq.s32.totalorder %s24, 1
      %p105 = por %p103, %p104
      %p106 = scmp.ne.s32.totalorder %s97, %s98
      %p107 = scmp.eq.s32.totalorder %s24, 0
      %p108 = por %p106, %p107
      %p109 = scmp.ne.s32.totalorder %s97, %s98
      %p110 = scmp.eq.s32.totalorder %s25, 1
      %p111 = por %p109, %p110
      %p113 = scmp.ne.s32.totalorder %s98, %s112
      %p114 = scmp.eq.s32.totalorder %s25, 0
      %p115 = por %p113, %p114
      %s117 = sadd.s32 %s116, 1
      %p120 = scmp.eq.s32.totalorder %s19, 1
      %p121 = scmp.ne.s32.totalorder %s116, %s118
      %p122 = scmp.eq.s32.totalorder %s19, 0
      %p123 = por %p121, %p122
      %p124 = scmp.ne.s32.totalorder %s116, %s118
      %p125 = scmp.eq.s32.totalorder %s24, 1
      %p126 = por %p124, %p125
      %p127 = scmp.ne.s32.totalorder %s118, %s119
      %p128 = scmp.eq.s32.totalorder %s24, 0
      %p129 = por %p127, %p128
      %p130 = scmp.ne.s32.totalorder %s118, %s119
      %p131 = scmp.eq.s32.totalorder %s25, 1
      %p132 = por %p130, %p131
      %p134 = scmp.ne.s32.totalorder %s119, %s133
      %p135 = scmp.eq.s32.totalorder %s25, 0
      %p136 = por %p134, %p135
      %s138 = sadd.s32 %s137, 1
      %p141 = scmp.eq.s32.totalorder %s19, 1
      %p142 = scmp.ne.s32.totalorder %s137, %s139
      %p143 = scmp.eq.s32.totalorder %s19, 0
      %p144 = por %p142, %p143
      %p145 = scmp.ne.s32.totalorder %s137, %s139
      %p146 = scmp.eq.s32.totalorder %s24, 1
      %p147 = por %p145, %p146
      %p148 = scmp.ne.s32.totalorder %s139, %s140
      %p149 = scmp.eq.s32.totalorder %s24, 0
      %p150 = por %p148, %p149
      %p151 = scmp.ne.s32.totalorder %s139, %s140
      %p152 = scmp.eq.s32.totalorder %s25, 1
      %p153 = por %p151, %p152
      %p155 = scmp.ne.s32.totalorder %s140, %s154
      %p156 = scmp.eq.s32.totalorder %s25, 0
      %p157 = por %p155, %p156
      %s159 = sadd.s32 %s158, 1
      %p162 = scmp.eq.s32.totalorder %s19, 1
      %p163 = scmp.ne.s32.totalorder %s158, %s160
      %p164 = scmp.eq.s32.totalorder %s19, 0
      %p165 = por %p163, %p164
      %p166 = scmp.ne.s32.totalorder %s158, %s160
      %p167 = scmp.eq.s32.totalorder %s24, 1
      %p168 = por %p166, %p167
      %p169 = scmp.ne.s32.totalorder %s160, %s161
      %p170 = scmp.eq.s32.totalorder %s24, 0
      %p171 = por %p169, %p170
      %p172 = scmp.ne.s32.totalorder %s160, %s161
      %p173 = scmp.eq.s32.totalorder %s25, 1
      %p174 = por %p172, %p173
      %p176 = scmp.ne.s32.totalorder %s161, %s175
      %p177 = scmp.eq.s32.totalorder %s25, 0
      %p178 = por %p176, %p177
      %s179 = ssub.s32 %s19, %s26
      %p180 = scmp.eq.s32.totalorder %s179, 0
      %s182 = sadd.s32 %s181, 1
      %s183 = scalar_select %p180, %s181, %s182
      %p186 = pneg %p180
      %p187 = scmp.eq.s32.totalorder %s19, 1
      %p188 = por %p186, %p187
      %p189 = scmp.ne.s32.totalorder %s181, %s184
      %p190 = scmp.eq.s32.totalorder %s19, 0
      %p191 = por %p189, %p190
      %p192 = scmp.ne.s32.totalorder %s181, %s184
      %p193 = scmp.eq.s32.totalorder %s24, 1
      %p194 = por %p192, %p193
      %p195 = scmp.ne.s32.totalorder %s184, %s185
      %p196 = scmp.eq.s32.totalorder %s24, 0
      %p197 = por %p195, %p196
      %p198 = scmp.ne.s32.totalorder %s184, %s185
      %p199 = scmp.eq.s32.totalorder %s25, 1
      %p200 = por %p198, %p199
      %p202 = scmp.ne.s32.totalorder %s185, %s201
      %p203 = scmp.eq.s32.totalorder %s25, 0
      %p204 = por %p202, %p203
      %p205 = scmp.le.s32.totalorder 1, %s19
      %p206 = scmp.lt.s32.totalorder %s19, 3
      %p207 = pnand %p205, %p206
      %p208 = pneg %p207
      // Predicated region
      $region9: #{tpu_custom_call.1} parent=5 // pred_check
        _
      $region10: #{tpu_custom_call.1} parent=5 // pred_check_branch
        %210 = sbr.rel (%p207) target = $region12
      $region11: #{tpu_custom_call.1} parent=5 // pred_region
        %s211 = ssub.s32 %s19, 1
        // Predicated region
        $region13: #{tpu_custom_call.1} parent=11 // pred_check
          %p212 = pneg %p66
        $region14: #{tpu_custom_call.1} parent=11 // pred_check_branch
          %214 = sbr.rel (%p212) target = $region16
        $region15: #{tpu_custom_call.1} parent=11 // pred_region
          %s216 = ssub.s32 16384, 16384
          %217 = vsyncadd [#allocation6], %s216
          %s218 = sshll.u32 [#allocation5], 4
          %s219 = int_to_ptr.vmem [resolvable:$true] %s218
          %224 = dma.hbm_to_vmem [thread:$0]  %s1, 16384, %s219, [#allocation6], 256, 256, 16
        $region16: #{tpu_custom_call.1} parent=11 // pred_fallthru
          _
        // Predicated region
        $region17: #{tpu_custom_call.1} parent=11 // pred_check
          %p225 = pneg %p87
        $region18: #{tpu_custom_call.1} parent=11 // pred_check_branch
          %227 = sbr.rel (%p225) target = $region20
        $region19: #{tpu_custom_call.1} parent=11 // pred_region
          _
        $region20: #{tpu_custom_call.1} parent=11 // pred_fallthru
          _
        // Predicated region
        $region21: #{tpu_custom_call.1} parent=11 // pred_check
          %p228 = pneg %p108
        $region22: #{tpu_custom_call.1} parent=11 // pred_check_branch
          %230 = sbr.rel (%p228) target = $region24
        $region23: #{tpu_custom_call.1} parent=11 // pred_region
          %s232 = ssub.s32 8192, 8192
          %233 = vsyncadd [#allocation6], %s232
          %s234 = sshll.u32 [#allocation7], 4
          %s235 = int_to_ptr.vmem [resolvable:$true] %s234
          %240 = dma.hbm_to_vmem [thread:$0]  %s3, 8192, %s235, [#allocation6], 128, 128, 8
        $region24: #{tpu_custom_call.1} parent=11 // pred_fallthru
          _
        // Predicated region
        $region25: #{tpu_custom_call.1} parent=11 // pred_check
          %p241 = pneg %p129
        $region26: #{tpu_custom_call.1} parent=11 // pred_check_branch
          %243 = sbr.rel (%p241) target = $region28
        $region27: #{tpu_custom_call.1} parent=11 // pred_region
          _
        $region28: #{tpu_custom_call.1} parent=11 // pred_fallthru
          _
        // Predicated region
        $region29: #{tpu_custom_call.1} parent=11 // pred_check
          %p244 = pneg %p150
        $region30: #{tpu_custom_call.1} parent=11 // pred_check_branch
          %246 = sbr.rel (%p244) target = $region32
        $region31: #{tpu_custom_call.1} parent=11 // pred_region
          _
        $region32: #{tpu_custom_call.1} parent=11 // pred_fallthru
          _
        // Predicated region
        $region33: #{tpu_custom_call.1} parent=11 // pred_check
          %p247 = pneg %p171
        $region34: #{tpu_custom_call.1} parent=11 // pred_check_branch
          %249 = sbr.rel (%p247) target = $region36
        $region35: #{tpu_custom_call.1} parent=11 // pred_region
          _
        $region36: #{tpu_custom_call.1} parent=11 // pred_fallthru
          _
      $region12: #{tpu_custom_call.1} parent=5 // pred_fallthru
        _
      %p250 = scmp.lt.s32.totalorder %s19, 2
      // Predicated region
      $region37: #{tpu_custom_call.1} parent=5 // pred_check
        %p251 = pneg %p250
      $region38: #{tpu_custom_call.1} parent=5 // pred_check_branch
        %253 = sbr.rel (%p251) target = $region40
      $region39: #{tpu_custom_call.1} parent=5 // pred_region
        // Predicated region
        $region41: #{tpu_custom_call.1} parent=39 // pred_check
          %p254 = pneg %p39
        $region42: #{tpu_custom_call.1} parent=39 // pred_check_branch
          %256 = sbr.rel (%p254) target = $region44
        $region43: #{tpu_custom_call.1} parent=39 // pred_region
          %s257 = sand.u32 %s29, 1
          %s258 = scalar_lea.sflag [#allocation4], %s257
          %s259 = sand.u32 %s29, 1
          %s260 = smul.addr %s259, 32
          %s261 = scalar_lea.vmem [#allocation3], %s260
          %s263 = ssub.s32 512, 512
          %264 = vsyncadd %s258, %s263
          %s265 = smul.addr %s19, 4
          %s266 = smul.addr %s265, 128
          %s267 = scalar_lea.hbm %s0, %s266
          %s269 = sshll.u32 %s261, 4
          %s270 = int_to_ptr.vmem [resolvable:$true] %s269
          %272 = dma.hbm_to_vmem [thread:$0]  %s267, 512, %s270, %s258
        $region44: #{tpu_custom_call.1} parent=39 // pred_fallthru
          _
      $region40: #{tpu_custom_call.1} parent=5 // pred_fallthru
        _
      %p273 = scmp.le.s32.totalorder 1, %s19
      %p274 = scmp.lt.s32.totalorder %s19, 3
      %p275 = pnand %p273, %p274
      %p276 = pneg %p275
      // Predicated region
      $region45: #{tpu_custom_call.1} parent=5 // pred_check
        _
      $region46: #{tpu_custom_call.1} parent=5 // pred_check_branch
        %278 = sbr.rel (%p275) target = $region48
      $region47: #{tpu_custom_call.1} parent=5 // pred_region
        %s279 = ssub.s32 %s19, 1
        %s280 = sand.u32 %s32, 1
        %s281 = scalar_lea.sflag [#allocation4], %s280
        %s282 = sand.u32 %s32, 1
        %s283 = smul.addr %s282, 32
        %s284 = scalar_lea.vmem [#allocation3], %s283
        // Predicated region
        $region49: #{tpu_custom_call.1} parent=47 // pred_check
          %p285 = pneg %p45
        $region50: #{tpu_custom_call.1} parent=47 // pred_check_branch
          %287 = sbr.rel (%p285) target = $region52
        $region51: #{tpu_custom_call.1} parent=47 // pred_region
          %288 = dma.done %s281, 512
        $region52: #{tpu_custom_call.1} parent=47 // pred_fallthru
          _
        // Predicated region
        $region53: #{tpu_custom_call.1} parent=47 // pred_check
          %p289 = pneg %p66
        $region54: #{tpu_custom_call.1} parent=47 // pred_check_branch
          %291 = sbr.rel (%p289) target = $region56
        $region55: #{tpu_custom_call.1} parent=47 // pred_region
          %292 = dma.done [#allocation6], 16384
        $region56: #{tpu_custom_call.1} parent=47 // pred_fallthru
          _
        // Predicated region
        $region57: #{tpu_custom_call.1} parent=47 // pred_check
          %p293 = pneg %p108
        $region58: #{tpu_custom_call.1} parent=47 // pred_check_branch
          %295 = sbr.rel (%p293) target = $region60
        $region59: #{tpu_custom_call.1} parent=47 // pred_region
          %296 = dma.done [#allocation6], 8192
        $region60: #{tpu_custom_call.1} parent=47 // pred_fallthru
          _
        %s297 = sand.u32 %s32, 1
        %s298 = scalar_lea.sflag [#allocation4], %s297
        %s299 = sand.u32 %s32, 1
        %s300 = smul.addr %s299, 32
        %s301 = scalar_lea.vmem [#allocation3], %s300
        %p302 = pneg %p45
        %p303 = pneg %p42
        %p304 = pneg %p66
        %p305 = pneg %p63
        %p306 = pneg %p87
        %p307 = pneg %p84
        %p308 = pneg %p108
        %p309 = pneg %p105
        %p310 = pneg %p129
        %p311 = pneg %p126
        %p312 = pneg %p150
        %p313 = pneg %p147
        %p314 = pneg %p171
        %p315 = pneg %p168
        %p316 = pneg %p197
        %p317 = pneg %p194
        %p318 = scmp.lt.s32.totalorder %s24, 1
        %s319 = scalar_select %p318, %s24, 1
        %s320 = smul.addr %s319, 8
        %s321 = scalar_lea.vmem %s7, %s320
        %p322 = scmp.lt.s32.totalorder %s24, 1
        %s323 = scalar_select %p322, %s24, 1
        %s324 = smul.addr %s323, 8
        %s325 = scalar_lea.vmem %s7, %s324
        %v326 = vld [vmem:[%s284] sm:$0xff]
        %v327 = vld [vmem:[%s284 + $0x8] sm:$0xff]
        %v328 = vld [vmem:[%s284 + $0x10] sm:$0xff]
        %v329 = vld [vmem:[%s284 + $0x18] sm:$0xff]
        %v330 = vpack.c.bf16 %v326, %v326
        %v331 = vpack.c.bf16 %v327, %v327
        %v332 = vpack.c.bf16 %v328, %v328
        %v333 = vpack.c.bf16 %v329, %v329
        %v334 = vld [vmem:[#allocation5] sm:$0xff]
        %v335 = vld [vmem:[#allocation5 + $0x8] sm:$0xff]
        %v336 = vld [vmem:[#allocation5 + $0x10] sm:$0xff]
        %v337 = vld [vmem:[#allocation5 + $0x18] sm:$0xff]
        %v338 = vld [vmem:[#allocation5 + $0x20] sm:$0xff]
        %v339 = vld [vmem:[#allocation5 + $0x28] sm:$0xff]
        %v340 = vld [vmem:[#allocation5 + $0x30] sm:$0xff]
        %v341 = vld [vmem:[#allocation5 + $0x38] sm:$0xff]
        %v342 = vld [vmem:[#allocation5 + $0x40] sm:$0xff]
        %v343 = vld [vmem:[#allocation5 + $0x48] sm:$0xff]
        %v344 = vld [vmem:[#allocation5 + $0x50] sm:$0xff]
        %v345 = vld [vmem:[#allocation5 + $0x58] sm:$0xff]
        %v346 = vld [vmem:[#allocation5 + $0x60] sm:$0xff]
        %v347 = vld [vmem:[#allocation5 + $0x68] sm:$0xff]
        %v348 = vld [vmem:[#allocation5 + $0x70] sm:$0xff]
        %v349 = vld [vmem:[#allocation5 + $0x78] sm:$0xff]
        %v350 = vld [vmem:[#allocation5 + $0x80] sm:$0xff]
        %v351 = vld [vmem:[#allocation5 + $0x88] sm:$0xff]
        %v352 = vld [vmem:[#allocation5 + $0x90] sm:$0xff]
        %v353 = vld [vmem:[#allocation5 + $0x98] sm:$0xff]
        %v354 = vld [vmem:[#allocation5 + $0xa0] sm:$0xff]
        %v355 = vld [vmem:[#allocation5 + $0xa8] sm:$0xff]
        %v356 = vld [vmem:[#allocation5 + $0xb0] sm:$0xff]
        %v357 = vld [vmem:[#allocation5 + $0xb8] sm:$0xff]
        %v358 = vld [vmem:[#allocation5 + $0xc0] sm:$0xff]
        %v359 = vld [vmem:[#allocation5 + $0xc8] sm:$0xff]
        %v360 = vld [vmem:[#allocation5 + $0xd0] sm:$0xff]
        %v361 = vld [vmem:[#allocation5 + $0xd8] sm:$0xff]
        %v362 = vld [vmem:[#allocation5 + $0xe0] sm:$0xff]
        %v363 = vld [vmem:[#allocation5 + $0xe8] sm:$0xff]
        %v364 = vld [vmem:[#allocation5 + $0xf0] sm:$0xff]
        %v365 = vld [vmem:[#allocation5 + $0xf8] sm:$0xff]
        %v366 = vld [vmem:[#allocation5 + $0x100] sm:$0xff]
        %v367 = vld [vmem:[#allocation5 + $0x108] sm:$0xff]
        %v368 = vld [vmem:[#allocation5 + $0x110] sm:$0xff]
        %v369 = vld [vmem:[#allocation5 + $0x118] sm:$0xff]
        %v370 = vld [vmem:[#allocation5 + $0x120] sm:$0xff]
        %v371 = vld [vmem:[#allocation5 + $0x128] sm:$0xff]
        %v372 = vld [vmem:[#allocation5 + $0x130] sm:$0xff]
        %v373 = vld [vmem:[#allocation5 + $0x138] sm:$0xff]
        %v374 = vld [vmem:[#allocation5 + $0x140] sm:$0xff]
        %v375 = vld [vmem:[#allocation5 + $0x148] sm:$0xff]
        %v376 = vld [vmem:[#allocation5 + $0x150] sm:$0xff]
        %v377 = vld [vmem:[#allocation5 + $0x158] sm:$0xff]
        %v378 = vld [vmem:[#allocation5 + $0x160] sm:$0xff]
        %v379 = vld [vmem:[#allocation5 + $0x168] sm:$0xff]
        %v380 = vld [vmem:[#allocation5 + $0x170] sm:$0xff]
        %v381 = vld [vmem:[#allocation5 + $0x178] sm:$0xff]
        %v382 = vld [vmem:[#allocation5 + $0x180] sm:$0xff]
        %v383 = vld [vmem:[#allocation5 + $0x188] sm:$0xff]
        %v384 = vld [vmem:[#allocation5 + $0x190] sm:$0xff]
        %v385 = vld [vmem:[#allocation5 + $0x198] sm:$0xff]
        %v386 = vld [vmem:[#allocation5 + $0x1a0] sm:$0xff]
        %v387 = vld [vmem:[#allocation5 + $0x1a8] sm:$0xff]
        %v388 = vld [vmem:[#allocation5 + $0x1b0] sm:$0xff]
        %v389 = vld [vmem:[#allocation5 + $0x1b8] sm:$0xff]
        %v390 = vld [vmem:[#allocation5 + $0x1c0] sm:$0xff]
        %v391 = vld [vmem:[#allocation5 + $0x1c8] sm:$0xff]
        %v392 = vld [vmem:[#allocation5 + $0x1d0] sm:$0xff]
        %v393 = vld [vmem:[#allocation5 + $0x1d8] sm:$0xff]
        %v394 = vld [vmem:[#allocation5 + $0x1e0] sm:$0xff]
        %v395 = vld [vmem:[#allocation5 + $0x1e8] sm:$0xff]
        %v396 = vld [vmem:[#allocation5 + $0x1f0] sm:$0xff]
        %v397 = vld [vmem:[#allocation5 + $0x1f8] sm:$0xff]
        %v398 = vld [vmem:[#allocation5 + $0x200] sm:$0xff]
        %v399 = vld [vmem:[#allocation5 + $0x208] sm:$0xff]
        %v400 = vld [vmem:[#allocation5 + $0x210] sm:$0xff]
        %v401 = vld [vmem:[#allocation5 + $0x218] sm:$0xff]
        %v402 = vld [vmem:[#allocation5 + $0x220] sm:$0xff]
        %v403 = vld [vmem:[#allocation5 + $0x228] sm:$0xff]
        %v404 = vld [vmem:[#allocation5 + $0x230] sm:$0xff]
        %v405 = vld [vmem:[#allocation5 + $0x238] sm:$0xff]
        %v406 = vld [vmem:[#allocation5 + $0x240] sm:$0xff]
        %v407 = vld [vmem:[#allocation5 + $0x248] sm:$0xff]
        %v408 = vld [vmem:[#allocation5 + $0x250] sm:$0xff]
        %v409 = vld [vmem:[#allocation5 + $0x258] sm:$0xff]
        %v410 = vld [vmem:[#allocation5 + $0x260] sm:$0xff]
        %v411 = vld [vmem:[#allocation5 + $0x268] sm:$0xff]
        %v412 = vld [vmem:[#allocation5 + $0x270] sm:$0xff]
        %v413 = vld [vmem:[#allocation5 + $0x278] sm:$0xff]
        %v414 = vld [vmem:[#allocation5 + $0x280] sm:$0xff]
        %v415 = vld [vmem:[#allocation5 + $0x288] sm:$0xff]
        %v416 = vld [vmem:[#allocation5 + $0x290] sm:$0xff]
        %v417 = vld [vmem:[#allocation5 + $0x298] sm:$0xff]
        %v418 = vld [vmem:[#allocation5 + $0x2a0] sm:$0xff]
        %v419 = vld [vmem:[#allocation5 + $0x2a8] sm:$0xff]
        %v420 = vld [vmem:[#allocation5 + $0x2b0] sm:$0xff]
        %v421 = vld [vmem:[#allocation5 + $0x2b8] sm:$0xff]
        %v422 = vld [vmem:[#allocation5 + $0x2c0] sm:$0xff]
        %v423 = vld [vmem:[#allocation5 + $0x2c8] sm:$0xff]
        %v424 = vld [vmem:[#allocation5 + $0x2d0] sm:$0xff]
        %v425 = vld [vmem:[#allocation5 + $0x2d8] sm:$0xff]
        %v426 = vld [vmem:[#allocation5 + $0x2e0] sm:$0xff]
        %v427 = vld [vmem:[#allocation5 + $0x2e8] sm:$0xff]
        %v428 = vld [vmem:[#allocation5 + $0x2f0] sm:$0xff]
        %v429 = vld [vmem:[#allocation5 + $0x2f8] sm:$0xff]
        %v430 = vld [vmem:[#allocation5 + $0x300] sm:$0xff]
        %v431 = vld [vmem:[#allocation5 + $0x308] sm:$0xff]
        %v432 = vld [vmem:[#allocation5 + $0x310] sm:$0xff]
        %v433 = vld [vmem:[#allocation5 + $0x318] sm:$0xff]
        %v434 = vld [vmem:[#allocation5 + $0x320] sm:$0xff]
        %v435 = vld [vmem:[#allocation5 + $0x328] sm:$0xff]
        %v436 = vld [vmem:[#allocation5 + $0x330] sm:$0xff]
        %v437 = vld [vmem:[#allocation5 + $0x338] sm:$0xff]
        %v438 = vld [vmem:[#allocation5 + $0x340] sm:$0xff]
        %v439 = vld [vmem:[#allocation5 + $0x348] sm:$0xff]
        %v440 = vld [vmem:[#allocation5 + $0x350] sm:$0xff]
        %v441 = vld [vmem:[#allocation5 + $0x358] sm:$0xff]
        %v442 = vld [vmem:[#allocation5 + $0x360] sm:$0xff]
        %v443 = vld [vmem:[#allocation5 + $0x368] sm:$0xff]
        %v444 = vld [vmem:[#allocation5 + $0x370] sm:$0xff]
        %v445 = vld [vmem:[#allocation5 + $0x378] sm:$0xff]
        %v446 = vld [vmem:[#allocation5 + $0x380] sm:$0xff]
        %v447 = vld [vmem:[#allocation5 + $0x388] sm:$0xff]
        %v448 = vld [vmem:[#allocation5 + $0x390] sm:$0xff]
        %v449 = vld [vmem:[#allocation5 + $0x398] sm:$0xff]
        %v450 = vld [vmem:[#allocation5 + $0x3a0] sm:$0xff]
        %v451 = vld [vmem:[#allocation5 + $0x3a8] sm:$0xff]
        %v452 = vld [vmem:[#allocation5 + $0x3b0] sm:$0xff]
        %v453 = vld [vmem:[#allocation5 + $0x3b8] sm:$0xff]
        %v454 = vld [vmem:[#allocation5 + $0x3c0] sm:$0xff]
        %v455 = vld [vmem:[#allocation5 + $0x3c8] sm:$0xff]
        %v456 = vld [vmem:[#allocation5 + $0x3d0] sm:$0xff]
        %v457 = vld [vmem:[#allocation5 + $0x3d8] sm:$0xff]
        %v458 = vld [vmem:[#allocation5 + $0x3e0] sm:$0xff]
        %v459 = vld [vmem:[#allocation5 + $0x3e8] sm:$0xff]
        %v460 = vld [vmem:[#allocation5 + $0x3f0] sm:$0xff]
        %v461 = vld [vmem:[#allocation5 + $0x3f8] sm:$0xff]
        %v462 = vld [vmem:[%s2] sm:$0xf]
        %v464 = vlaneseq
        %v465 = vshrl.u32 %v464, 7
        %v466 = vsub.s32 0, %v465
        %v467 = vrot.slane %v462, %v466
        %v468 = vlaneseq
        %v469 = vshrl.u32 %v468, 7
        %v470 = vsub.s32 1, %v469
        %v471 = vrot.slane %v462, %v470
        %v472 = vlaneseq
        %v473 = vshrl.u32 %v472, 7
        %v474 = vsub.s32 2, %v473
        %v475 = vrot.slane %v462, %v474
        %v476 = vlaneseq
        %v477 = vshrl.u32 %v476, 7
        %v478 = vsub.s32 3, %v477
        %v479 = vrot.slane %v462, %v478
        %v612 = vunpack.c.l.b16 %v334
        %v613 = vunpack.c.h.b16 %v334
        %v614 = vunpack.c.l.b16 %v335
        %v615 = vunpack.c.h.b16 %v335
        %v616 = vunpack.c.l.b16 %v336
        %v617 = vunpack.c.h.b16 %v336
        %v618 = vunpack.c.l.b16 %v337
        %v619 = vunpack.c.h.b16 %v337
        %v620 = vunpack.c.l.b16 %v338
        %v621 = vunpack.c.h.b16 %v338
        %v622 = vunpack.c.l.b16 %v339
        %v623 = vunpack.c.h.b16 %v339
        %v624 = vunpack.c.l.b16 %v340
        %v625 = vunpack.c.h.b16 %v340
        %v626 = vunpack.c.l.b16 %v341
        %v627 = vunpack.c.h.b16 %v341
        %v628 = vunpack.c.l.b16 %v342
        %v629 = vunpack.c.h.b16 %v342
        %v630 = vunpack.c.l.b16 %v343
        %v631 = vunpack.c.h.b16 %v343
        %v632 = vunpack.c.l.b16 %v344
        %v633 = vunpack.c.h.b16 %v344
        %v634 = vunpack.c.l.b16 %v345
        %v635 = vunpack.c.h.b16 %v345
        %v636 = vunpack.c.l.b16 %v346
        %v637 = vunpack.c.h.b16 %v346
        %v638 = vunpack.c.l.b16 %v347
        %v639 = vunpack.c.h.b16 %v347
        %v640 = vunpack.c.l.b16 %v348
        %v641 = vunpack.c.h.b16 %v348
        %v642 = vunpack.c.l.b16 %v349
        %v643 = vunpack.c.h.b16 %v349
        %v644 = vunpack.c.l.b16 %v350
        %v645 = vunpack.c.h.b16 %v350
        %v646 = vunpack.c.l.b16 %v351
        %v647 = vunpack.c.h.b16 %v351
        %v648 = vunpack.c.l.b16 %v352
        %v649 = vunpack.c.h.b16 %v352
        %v650 = vunpack.c.l.b16 %v353
        %v651 = vunpack.c.h.b16 %v353
        %v652 = vunpack.c.l.b16 %v354
        %v653 = vunpack.c.h.b16 %v354
        %v654 = vunpack.c.l.b16 %v355
        %v655 = vunpack.c.h.b16 %v355
        %v656 = vunpack.c.l.b16 %v356
        %v657 = vunpack.c.h.b16 %v356
        %v658 = vunpack.c.l.b16 %v357
        %v659 = vunpack.c.h.b16 %v357
        %v660 = vunpack.c.l.b16 %v358
        %v661 = vunpack.c.h.b16 %v358
        %v662 = vunpack.c.l.b16 %v359
        %v663 = vunpack.c.h.b16 %v359
        %v664 = vunpack.c.l.b16 %v360
        %v665 = vunpack.c.h.b16 %v360
        %v666 = vunpack.c.l.b16 %v361
        %v667 = vunpack.c.h.b16 %v361
        %v668 = vunpack.c.l.b16 %v362
        %v669 = vunpack.c.h.b16 %v362
        %v670 = vunpack.c.l.b16 %v363
        %v671 = vunpack.c.h.b16 %v363
        %v672 = vunpack.c.l.b16 %v364
        %v673 = vunpack.c.h.b16 %v364
        %v674 = vunpack.c.l.b16 %v365
        %v675 = vunpack.c.h.b16 %v365
        %v676 = vunpack.c.l.b16 %v366
        %v677 = vunpack.c.h.b16 %v366
        %v678 = vunpack.c.l.b16 %v367
        %v679 = vunpack.c.h.b16 %v367
        %v680 = vunpack.c.l.b16 %v368
        %v681 = vunpack.c.h.b16 %v368
        %v682 = vunpack.c.l.b16 %v369
        %v683 = vunpack.c.h.b16 %v369
        %v684 = vunpack.c.l.b16 %v370
        %v685 = vunpack.c.h.b16 %v370
        %v686 = vunpack.c.l.b16 %v371
        %v687 = vunpack.c.h.b16 %v371
        %v688 = vunpack.c.l.b16 %v372
        %v689 = vunpack.c.h.b16 %v372
        %v690 = vunpack.c.l.b16 %v373
        %v691 = vunpack.c.h.b16 %v373
        %v692 = vunpack.c.l.b16 %v374
        %v693 = vunpack.c.h.b16 %v374
        %v694 = vunpack.c.l.b16 %v375
        %v695 = vunpack.c.h.b16 %v375
        %v696 = vunpack.c.l.b16 %v376
        %v697 = vunpack.c.h.b16 %v376
        %v698 = vunpack.c.l.b16 %v377
        %v699 = vunpack.c.h.b16 %v377
        %v700 = vunpack.c.l.b16 %v378
        %v701 = vunpack.c.h.b16 %v378
        %v702 = vunpack.c.l.b16 %v379
        %v703 = vunpack.c.h.b16 %v379
        %v704 = vunpack.c.l.b16 %v380
        %v705 = vunpack.c.h.b16 %v380
        %v706 = vunpack.c.l.b16 %v381
        %v707 = vunpack.c.h.b16 %v381
        %v708 = vunpack.c.l.b16 %v382
        %v709 = vunpack.c.h.b16 %v382
        %v710 = vunpack.c.l.b16 %v383
        %v711 = vunpack.c.h.b16 %v383
        %v712 = vunpack.c.l.b16 %v384
        %v713 = vunpack.c.h.b16 %v384
        %v714 = vunpack.c.l.b16 %v385
        %v715 = vunpack.c.h.b16 %v385
        %v716 = vunpack.c.l.b16 %v386
        %v717 = vunpack.c.h.b16 %v386
        %v718 = vunpack.c.l.b16 %v387
        %v719 = vunpack.c.h.b16 %v387
        %v720 = vunpack.c.l.b16 %v388
        %v721 = vunpack.c.h.b16 %v388
        %v722 = vunpack.c.l.b16 %v389
        %v723 = vunpack.c.h.b16 %v389
        %v724 = vunpack.c.l.b16 %v390
        %v725 = vunpack.c.h.b16 %v390
        %v726 = vunpack.c.l.b16 %v391
        %v727 = vunpack.c.h.b16 %v391
        %v728 = vunpack.c.l.b16 %v392
        %v729 = vunpack.c.h.b16 %v392
        %v730 = vunpack.c.l.b16 %v393
        %v731 = vunpack.c.h.b16 %v393
        %v732 = vunpack.c.l.b16 %v394
        %v733 = vunpack.c.h.b16 %v394
        %v734 = vunpack.c.l.b16 %v395
        %v735 = vunpack.c.h.b16 %v395
        %v736 = vunpack.c.l.b16 %v396
        %v737 = vunpack.c.h.b16 %v396
        %v738 = vunpack.c.l.b16 %v397
        %v739 = vunpack.c.h.b16 %v397
        %v740 = vunpack.c.l.b16 %v398
        %v741 = vunpack.c.h.b16 %v398
        %v742 = vunpack.c.l.b16 %v399
        %v743 = vunpack.c.h.b16 %v399
        %v744 = vunpack.c.l.b16 %v400
        %v745 = vunpack.c.h.b16 %v400
        %v746 = vunpack.c.l.b16 %v401
        %v747 = vunpack.c.h.b16 %v401
        %v748 = vunpack.c.l.b16 %v402
        %v749 = vunpack.c.h.b16 %v402
        %v750 = vunpack.c.l.b16 %v403
        %v751 = vunpack.c.h.b16 %v403
        %v752 = vunpack.c.l.b16 %v404
        %v753 = vunpack.c.h.b16 %v404
        %v754 = vunpack.c.l.b16 %v405
        %v755 = vunpack.c.h.b16 %v405
        %v756 = vunpack.c.l.b16 %v406
        %v757 = vunpack.c.h.b16 %v406
        %v758 = vunpack.c.l.b16 %v407
        %v759 = vunpack.c.h.b16 %v407
        %v760 = vunpack.c.l.b16 %v408
        %v761 = vunpack.c.h.b16 %v408
        %v762 = vunpack.c.l.b16 %v409
        %v763 = vunpack.c.h.b16 %v409
        %v764 = vunpack.c.l.b16 %v410
        %v765 = vunpack.c.h.b16 %v410
        %v766 = vunpack.c.l.b16 %v411
        %v767 = vunpack.c.h.b16 %v411
        %v768 = vunpack.c.l.b16 %v412
        %v769 = vunpack.c.h.b16 %v412
        %v770 = vunpack.c.l.b16 %v413
        %v771 = vunpack.c.h.b16 %v413
        %v772 = vunpack.c.l.b16 %v414
        %v773 = vunpack.c.h.b16 %v414
        %v774 = vunpack.c.l.b16 %v415
        %v775 = vunpack.c.h.b16 %v415
        %v776 = vunpack.c.l.b16 %v416
        %v777 = vunpack.c.h.b16 %v416
        %v778 = vunpack.c.l.b16 %v417
        %v779 = vunpack.c.h.b16 %v417
        %v780 = vunpack.c.l.b16 %v418
        %v781 = vunpack.c.h.b16 %v418
        %v782 = vunpack.c.l.b16 %v419
        %v783 = vunpack.c.h.b16 %v419
        %v784 = vunpack.c.l.b16 %v420
        %v785 = vunpack.c.h.b16 %v420
        %v786 = vunpack.c.l.b16 %v421
        %v787 = vunpack.c.h.b16 %v421
        %v788 = vunpack.c.l.b16 %v422
        %v789 = vunpack.c.h.b16 %v422
        %v790 = vunpack.c.l.b16 %v423
        %v791 = vunpack.c.h.b16 %v423
        %v792 = vunpack.c.l.b16 %v424
        %v793 = vunpack.c.h.b16 %v424
        %v794 = vunpack.c.l.b16 %v425
        %v795 = vunpack.c.h.b16 %v425
        %v796 = vunpack.c.l.b16 %v426
        %v797 = vunpack.c.h.b16 %v426
        %v798 = vunpack.c.l.b16 %v427
        %v799 = vunpack.c.h.b16 %v427
        %v800 = vunpack.c.l.b16 %v428
        %v801 = vunpack.c.h.b16 %v428
        %v802 = vunpack.c.l.b16 %v429
        %v803 = vunpack.c.h.b16 %v429
        %v804 = vunpack.c.l.b16 %v430
        %v805 = vunpack.c.h.b16 %v430
        %v806 = vunpack.c.l.b16 %v431
        %v807 = vunpack.c.h.b16 %v431
        %v808 = vunpack.c.l.b16 %v432
        %v809 = vunpack.c.h.b16 %v432
        %v810 = vunpack.c.l.b16 %v433
        %v811 = vunpack.c.h.b16 %v433
        %v812 = vunpack.c.l.b16 %v434
        %v813 = vunpack.c.h.b16 %v434
        %v814 = vunpack.c.l.b16 %v435
        %v815 = vunpack.c.h.b16 %v435
        %v816 = vunpack.c.l.b16 %v436
        %v817 = vunpack.c.h.b16 %v436
        %v818 = vunpack.c.l.b16 %v437
        %v819 = vunpack.c.h.b16 %v437
        %v820 = vunpack.c.l.b16 %v438
        %v821 = vunpack.c.h.b16 %v438
        %v822 = vunpack.c.l.b16 %v439
        %v823 = vunpack.c.h.b16 %v439
        %v824 = vunpack.c.l.b16 %v440
        %v825 = vunpack.c.h.b16 %v440
        %v826 = vunpack.c.l.b16 %v441
        %v827 = vunpack.c.h.b16 %v441
        %v828 = vunpack.c.l.b16 %v442
        %v829 = vunpack.c.h.b16 %v442
        %v830 = vunpack.c.l.b16 %v443
        %v831 = vunpack.c.h.b16 %v443
        %v832 = vunpack.c.l.b16 %v444
        %v833 = vunpack.c.h.b16 %v444
        %v834 = vunpack.c.l.b16 %v445
        %v835 = vunpack.c.h.b16 %v445
        %v836 = vunpack.c.l.b16 %v446
        %v837 = vunpack.c.h.b16 %v446
        %v838 = vunpack.c.l.b16 %v447
        %v839 = vunpack.c.h.b16 %v447
        %v840 = vunpack.c.l.b16 %v448
        %v841 = vunpack.c.h.b16 %v448
        %v842 = vunpack.c.l.b16 %v449
        %v843 = vunpack.c.h.b16 %v449
        %v844 = vunpack.c.l.b16 %v450
        %v845 = vunpack.c.h.b16 %v450
        %v846 = vunpack.c.l.b16 %v451
        %v847 = vunpack.c.h.b16 %v451
        %v848 = vunpack.c.l.b16 %v452
        %v849 = vunpack.c.h.b16 %v452
        %v850 = vunpack.c.l.b16 %v453
        %v851 = vunpack.c.h.b16 %v453
        %v852 = vunpack.c.l.b16 %v454
        %v853 = vunpack.c.h.b16 %v454
        %v854 = vunpack.c.l.b16 %v455
        %v855 = vunpack.c.h.b16 %v455
        %v856 = vunpack.c.l.b16 %v456
        %v857 = vunpack.c.h.b16 %v456
        %v858 = vunpack.c.l.b16 %v457
        %v859 = vunpack.c.h.b16 %v457
        %v860 = vunpack.c.l.b16 %v458
        %v861 = vunpack.c.h.b16 %v458
        %v862 = vunpack.c.l.b16 %v459
        %v863 = vunpack.c.h.b16 %v459
        %v864 = vunpack.c.l.b16 %v460
        %v865 = vunpack.c.h.b16 %v460
        %v866 = vunpack.c.l.b16 %v461
        %v867 = vunpack.c.h.b16 %v461
        %v868 = vpack.c.b16 %v616, %v612
        %v869 = vpack.c.b16 %v617, %v613
        %v870 = vpack.c.b16 %v618, %v614
        %v871 = vpack.c.b16 %v619, %v615
        %v872 = vpack.c.b16 %v624, %v620
        %v873 = vpack.c.b16 %v625, %v621
        %v874 = vpack.c.b16 %v626, %v622
        %v875 = vpack.c.b16 %v627, %v623
        %v876 = vpack.c.b16 %v632, %v628
        %v877 = vpack.c.b16 %v633, %v629
        %v878 = vpack.c.b16 %v634, %v630
        %v879 = vpack.c.b16 %v635, %v631
        %v880 = vpack.c.b16 %v640, %v636
        %v881 = vpack.c.b16 %v641, %v637
        %v882 = vpack.c.b16 %v642, %v638
        %v883 = vpack.c.b16 %v643, %v639
        %v884 = vpack.c.b16 %v648, %v644
        %v885 = vpack.c.b16 %v649, %v645
        %v886 = vpack.c.b16 %v650, %v646
        %v887 = vpack.c.b16 %v651, %v647
        %v888 = vpack.c.b16 %v656, %v652
        %v889 = vpack.c.b16 %v657, %v653
        %v890 = vpack.c.b16 %v658, %v654
        %v891 = vpack.c.b16 %v659, %v655
        %v892 = vpack.c.b16 %v664, %v660
        %v893 = vpack.c.b16 %v665, %v661
        %v894 = vpack.c.b16 %v666, %v662
        %v895 = vpack.c.b16 %v667, %v663
        %v896 = vpack.c.b16 %v672, %v668
        %v897 = vpack.c.b16 %v673, %v669
        %v898 = vpack.c.b16 %v674, %v670
        %v899 = vpack.c.b16 %v675, %v671
        %v900 = vpack.c.b16 %v680, %v676
        %v901 = vpack.c.b16 %v681, %v677
        %v902 = vpack.c.b16 %v682, %v678
        %v903 = vpack.c.b16 %v683, %v679
        %v904 = vpack.c.b16 %v688, %v684
        %v905 = vpack.c.b16 %v689, %v685
        %v906 = vpack.c.b16 %v690, %v686
        %v907 = vpack.c.b16 %v691, %v687
        %v908 = vpack.c.b16 %v696, %v692
        %v909 = vpack.c.b16 %v697, %v693
        %v910 = vpack.c.b16 %v698, %v694
        %v911 = vpack.c.b16 %v699, %v695
        %v912 = vpack.c.b16 %v704, %v700
        %v913 = vpack.c.b16 %v705, %v701
        %v914 = vpack.c.b16 %v706, %v702
        %v915 = vpack.c.b16 %v707, %v703
        %v916 = vpack.c.b16 %v712, %v708
        %v917 = vpack.c.b16 %v713, %v709
        %v918 = vpack.c.b16 %v714, %v710
        %v919 = vpack.c.b16 %v715, %v711
        %v920 = vpack.c.b16 %v720, %v716
        %v921 = vpack.c.b16 %v721, %v717
        %v922 = vpack.c.b16 %v722, %v718
        %v923 = vpack.c.b16 %v723, %v719
        %v924 = vpack.c.b16 %v728, %v724
        %v925 = vpack.c.b16 %v729, %v725
        %v926 = vpack.c.b16 %v730, %v726
        %v927 = vpack.c.b16 %v731, %v727
        %v928 = vpack.c.b16 %v736, %v732
        %v929 = vpack.c.b16 %v737, %v733
        %v930 = vpack.c.b16 %v738, %v734
        %v931 = vpack.c.b16 %v739, %v735
        %v932 = vpack.c.b16 %v744, %v740
        %v933 = vpack.c.b16 %v745, %v741
        %v934 = vpack.c.b16 %v746, %v742
        %v935 = vpack.c.b16 %v747, %v743
        %v936 = vpack.c.b16 %v752, %v748
        %v937 = vpack.c.b16 %v753, %v749
        %v938 = vpack.c.b16 %v754, %v750
        %v939 = vpack.c.b16 %v755, %v751
        %v940 = vpack.c.b16 %v760, %v756
        %v941 = vpack.c.b16 %v761, %v757
        %v942 = vpack.c.b16 %v762, %v758
        %v943 = vpack.c.b16 %v763, %v759
        %v944 = vpack.c.b16 %v768, %v764
        %v945 = vpack.c.b16 %v769, %v765
        %v946 = vpack.c.b16 %v770, %v766
        %v947 = vpack.c.b16 %v771, %v767
        %v948 = vpack.c.b16 %v776, %v772
        %v949 = vpack.c.b16 %v777, %v773
        %v950 = vpack.c.b16 %v778, %v774
        %v951 = vpack.c.b16 %v779, %v775
        %v952 = vpack.c.b16 %v784, %v780
        %v953 = vpack.c.b16 %v785, %v781
        %v954 = vpack.c.b16 %v786, %v782
        %v955 = vpack.c.b16 %v787, %v783
        %v956 = vpack.c.b16 %v792, %v788
        %v957 = vpack.c.b16 %v793, %v789
        %v958 = vpack.c.b16 %v794, %v790
        %v959 = vpack.c.b16 %v795, %v791
        %v960 = vpack.c.b16 %v800, %v796
        %v961 = vpack.c.b16 %v801, %v797
        %v962 = vpack.c.b16 %v802, %v798
        %v963 = vpack.c.b16 %v803, %v799
        %v964 = vpack.c.b16 %v808, %v804
        %v965 = vpack.c.b16 %v809, %v805
        %v966 = vpack.c.b16 %v810, %v806
        %v967 = vpack.c.b16 %v811, %v807
        %v968 = vpack.c.b16 %v816, %v812
        %v969 = vpack.c.b16 %v817, %v813
        %v970 = vpack.c.b16 %v818, %v814
        %v971 = vpack.c.b16 %v819, %v815
        %v972 = vpack.c.b16 %v824, %v820
        %v973 = vpack.c.b16 %v825, %v821
        %v974 = vpack.c.b16 %v826, %v822
        %v975 = vpack.c.b16 %v827, %v823
        %v976 = vpack.c.b16 %v832, %v828
        %v977 = vpack.c.b16 %v833, %v829
        %v978 = vpack.c.b16 %v834, %v830
        %v979 = vpack.c.b16 %v835, %v831
        %v980 = vpack.c.b16 %v840, %v836
        %v981 = vpack.c.b16 %v841, %v837
        %v982 = vpack.c.b16 %v842, %v838
        %v983 = vpack.c.b16 %v843, %v839
        %v984 = vpack.c.b16 %v848, %v844
        %v985 = vpack.c.b16 %v849, %v845
        %v986 = vpack.c.b16 %v850, %v846
        %v987 = vpack.c.b16 %v851, %v847
        %v988 = vpack.c.b16 %v856, %v852
        %v989 = vpack.c.b16 %v857, %v853
        %v990 = vpack.c.b16 %v858, %v854
        %v991 = vpack.c.b16 %v859, %v855
        %v992 = vpack.c.b16 %v864, %v860
        %v993 = vpack.c.b16 %v865, %v861
        %v994 = vpack.c.b16 %v866, %v862
        %v995 = vpack.c.b16 %v867, %v863
        %1124 = vmatprep.subr.bf16.mxu0 %v869
        %1125 = vmatpush1.bf16.msra.mxu0 %v868
        %1126 = vmatprep.subr.bf16.mxu0 %v873
        %1127 = vmatpush1.bf16.msra.mxu0 %v872
        %1128 = vmatprep.subr.bf16.mxu0 %v877
        %1129 = vmatpush1.bf16.msra.mxu0 %v876
        %1130 = vmatprep.subr.bf16.mxu0 %v881
        %1131 = vmatpush1.bf16.msra.mxu0 %v880
        %1132 = vmatprep.subr.bf16.mxu0 %v885
        %1133 = vmatpush1.bf16.msra.mxu0 %v884
        %1134 = vmatprep.subr.bf16.mxu0 %v889
        %1135 = vmatpush1.bf16.msra.mxu0 %v888
        %1136 = vmatprep.subr.bf16.mxu0 %v893
        %1137 = vmatpush1.bf16.msra.mxu0 %v892
        %1138 = vmatprep.subr.bf16.mxu0 %v897
        %1139 = vmatpush1.bf16.msra.mxu0 %v896
        %1140 = vmatprep.subr.bf16.mxu0 %v901
        %1141 = vmatpush1.bf16.msra.mxu0 %v900
        %1142 = vmatprep.subr.bf16.mxu0 %v905
        %1143 = vmatpush1.bf16.msra.mxu0 %v904
        %1144 = vmatprep.subr.bf16.mxu0 %v909
        %1145 = vmatpush1.bf16.msra.mxu0 %v908
        %1146 = vmatprep.subr.bf16.mxu0 %v913
        %1147 = vmatpush1.bf16.msra.mxu0 %v912
        %1148 = vmatprep.subr.bf16.mxu0 %v917
        %1149 = vmatpush1.bf16.msra.mxu0 %v916
        %1150 = vmatprep.subr.bf16.mxu0 %v921
        %1151 = vmatpush1.bf16.msra.mxu0 %v920
        %1152 = vmatprep.subr.bf16.mxu0 %v925
        %1153 = vmatpush1.bf16.msra.mxu0 %v924
        %1154 = vmatprep.subr.bf16.mxu0 %v929
        %1155 = vmatpush1.bf16.msra.mxu0 %v928
        %1156 = vmatprep.mubr.bf16.mxu0 %v331
        %1157 = vmatmul.mubr.bf16.gmra.mrb[0].mxu0 %v330
        %v1158 = vpop.f32.mrb[0].mxu0
        %v1159 = vadd.f32 %v467, %v1158
        %v1160 = vpop.f32.mrb[0].mxu0
        %v1161 = vadd.f32 %v471, %v1160
        %v1162 = vpop.f32.mrb[0].mxu0
        %v1163 = vpop.f32.mrb[0].mxu0
        %1164 = vdwg.mxu0
        %1165 = vmatprep.subr.bf16.mxu0 %v933
        %1166 = vmatpush1.bf16.msra.mxu0 %v932
        %1167 = vmatprep.subr.bf16.mxu0 %v937
        %1168 = vmatpush1.bf16.msra.mxu0 %v936
        %1169 = vmatprep.subr.bf16.mxu0 %v941
        %1170 = vmatpush1.bf16.msra.mxu0 %v940
        %1171 = vmatprep.subr.bf16.mxu0 %v945
        %1172 = vmatpush1.bf16.msra.mxu0 %v944
        %1173 = vmatprep.subr.bf16.mxu0 %v949
        %1174 = vmatpush1.bf16.msra.mxu0 %v948
        %1175 = vmatprep.subr.bf16.mxu0 %v953
        %1176 = vmatpush1.bf16.msra.mxu0 %v952
        %1177 = vmatprep.subr.bf16.mxu0 %v957
        %1178 = vmatpush1.bf16.msra.mxu0 %v956
        %1179 = vmatprep.subr.bf16.mxu0 %v961
        %1180 = vmatpush1.bf16.msra.mxu0 %v960
        %1181 = vmatprep.subr.bf16.mxu0 %v965
        %1182 = vmatpush1.bf16.msra.mxu0 %v964
        %1183 = vmatprep.subr.bf16.mxu0 %v969
        %1184 = vmatpush1.bf16.msra.mxu0 %v968
        %1185 = vmatprep.subr.bf16.mxu0 %v973
        %1186 = vmatpush1.bf16.msra.mxu0 %v972
        %1187 = vmatprep.subr.bf16.mxu0 %v977
        %1188 = vmatpush1.bf16.msra.mxu0 %v976
        %1189 = vmatprep.subr.bf16.mxu0 %v981
        %1190 = vmatpush1.bf16.msra.mxu0 %v980
        %1191 = vmatprep.subr.bf16.mxu0 %v985
        %1192 = vmatpush1.bf16.msra.mxu0 %v984
        %1193 = vmatprep.subr.bf16.mxu0 %v989
        %1194 = vmatpush1.bf16.msra.mxu0 %v988
        %1195 = vmatprep.subr.bf16.mxu0 %v993
        %1196 = vmatpush1.bf16.msra.mxu0 %v992
        %1197 = vmatprep.mubr.bf16.mxu0 %v333
        %1198 = vmatmul.mubr.bf16.gmra.mrb[0].mxu0 %v332
        %v1199 = vpop.f32.mrb[0].mxu0
        %v1200 = vadd.f32 %v1159, %v1199
        %v1201 = vpop.f32.mrb[0].mxu0
        %v1202 = vadd.f32 %v1161, %v1201
        %v1203 = vpop.f32.mrb[0].mxu0
        %v1204 = vpop.f32.mrb[0].mxu0
        %1205 = vdwg.mxu0
        %1206 = vmatprep.subr.bf16.mxu0 %v871
        %1207 = vmatpush1.bf16.msra.mxu0 %v870
        %1208 = vmatprep.subr.bf16.mxu0 %v875
        %1209 = vmatpush1.bf16.msra.mxu0 %v874
        %1210 = vmatprep.subr.bf16.mxu0 %v879
        %1211 = vmatpush1.bf16.msra.mxu0 %v878
        %1212 = vmatprep.subr.bf16.mxu0 %v883
        %1213 = vmatpush1.bf16.msra.mxu0 %v882
        %1214 = vmatprep.subr.bf16.mxu0 %v887
        %1215 = vmatpush1.bf16.msra.mxu0 %v886
        %1216 = vmatprep.subr.bf16.mxu0 %v891
        %1217 = vmatpush1.bf16.msra.mxu0 %v890
        %1218 = vmatprep.subr.bf16.mxu0 %v895
        %1219 = vmatpush1.bf16.msra.mxu0 %v894
        %1220 = vmatprep.subr.bf16.mxu0 %v899
        %1221 = vmatpush1.bf16.msra.mxu0 %v898
        %1222 = vmatprep.subr.bf16.mxu0 %v903
        %1223 = vmatpush1.bf16.msra.mxu0 %v902
        %1224 = vmatprep.subr.bf16.mxu0 %v907
        %1225 = vmatpush1.bf16.msra.mxu0 %v906
        %1226 = vmatprep.subr.bf16.mxu0 %v911
        %1227 = vmatpush1.bf16.msra.mxu0 %v910
        %1228 = vmatprep.subr.bf16.mxu0 %v915
        %1229 = vmatpush1.bf16.msra.mxu0 %v914
        %1230 = vmatprep.subr.bf16.mxu0 %v919
        %1231 = vmatpush1.bf16.msra.mxu0 %v918
        %1232 = vmatprep.subr.bf16.mxu0 %v923
        %1233 = vmatpush1.bf16.msra.mxu0 %v922
        %1234 = vmatprep.subr.bf16.mxu0 %v927
        %1235 = vmatpush1.bf16.msra.mxu0 %v926
        %1236 = vmatprep.subr.bf16.mxu0 %v931
        %1237 = vmatpush1.bf16.msra.mxu0 %v930
        %1238 = vmatprep.mubr.bf16.mxu0 %v331
        %1239 = vmatmul.mubr.bf16.gmra.mrb[0].mxu0 %v330
        %v1240 = vpop.f32.mrb[0].mxu0
        %v1241 = vadd.f32 %v475, %v1240
        %v1242 = vpop.f32.mrb[0].mxu0
        %v1243 = vadd.f32 %v479, %v1242
        %v1244 = vpop.f32.mrb[0].mxu0
        %v1245 = vpop.f32.mrb[0].mxu0
        %1246 = vdwg.mxu0
        %1247 = vmatprep.subr.bf16.mxu0 %v935
        %1248 = vmatpush1.bf16.msra.mxu0 %v934
        %1249 = vmatprep.subr.bf16.mxu0 %v939
        %1250 = vmatpush1.bf16.msra.mxu0 %v938
        %1251 = vmatprep.subr.bf16.mxu0 %v943
        %1252 = vmatpush1.bf16.msra.mxu0 %v942
        %1253 = vmatprep.subr.bf16.mxu0 %v947
        %1254 = vmatpush1.bf16.msra.mxu0 %v946
        %1255 = vmatprep.subr.bf16.mxu0 %v951
        %1256 = vmatpush1.bf16.msra.mxu0 %v950
        %1257 = vmatprep.subr.bf16.mxu0 %v955
        %1258 = vmatpush1.bf16.msra.mxu0 %v954
        %1259 = vmatprep.subr.bf16.mxu0 %v959
        %1260 = vmatpush1.bf16.msra.mxu0 %v958
        %1261 = vmatprep.subr.bf16.mxu0 %v963
        %1262 = vmatpush1.bf16.msra.mxu0 %v962
        %1263 = vmatprep.subr.bf16.mxu0 %v967
        %1264 = vmatpush1.bf16.msra.mxu0 %v966
        %1265 = vmatprep.subr.bf16.mxu0 %v971
        %1266 = vmatpush1.bf16.msra.mxu0 %v970
        %1267 = vmatprep.subr.bf16.mxu0 %v975
        %1268 = vmatpush1.bf16.msra.mxu0 %v974
        %1269 = vmatprep.subr.bf16.mxu0 %v979
        %1270 = vmatpush1.bf16.msra.mxu0 %v978
        %1271 = vmatprep.subr.bf16.mxu0 %v983
        %1272 = vmatpush1.bf16.msra.mxu0 %v982
        %1273 = vmatprep.subr.bf16.mxu0 %v987
        %1274 = vmatpush1.bf16.msra.mxu0 %v986
        %1275 = vmatprep.subr.bf16.mxu0 %v991
        %1276 = vmatpush1.bf16.msra.mxu0 %v990
        %1277 = vmatprep.subr.bf16.mxu0 %v995
        %1278 = vmatpush1.bf16.msra.mxu0 %v994
        %1279 = vmatprep.mubr.bf16.mxu0 %v333
        %1280 = vmatmul.mubr.bf16.gmra.mrb[0].mxu0 %v332
        %v1281 = vpop.f32.mrb[0].mxu0
        %v1282 = vadd.f32 %v1241, %v1281
        %v1283 = vpop.f32.mrb[0].mxu0
        %v1284 = vadd.f32 %v1243, %v1283
        %v1285 = vpop.f32.mrb[0].mxu0
        %v1286 = vpop.f32.mrb[0].mxu0
        %1287 = vdwg.mxu0
        %vm1288 = vcmp.gt.f32.partialorder %v1200, 0.0
        %vm1289 = vcmp.gt.f32.partialorder %v1202, 0.0
        %vm1290 = vcmp.gt.f32.partialorder %v1282, 0.0
        %vm1291 = vcmp.gt.f32.partialorder %v1284, 0.0
        %v1292 = vmul.f32 %v1200, 0.2
        %v1293 = vmul.f32 %v1202, 0.2
        %v1294 = vmul.f32 %v1282, 0.2
        %v1295 = vmul.f32 %v1284, 0.2
        %v1296 = vsel %vm1288, %v1200, %v1292
        %v1297 = vsel %vm1289, %v1202, %v1293
        %v1298 = vsel %vm1290, %v1282, %v1294
        %v1299 = vsel %vm1291, %v1284, %v1295
        %v1300 = vpack.c.bf16 %v1296, %v1296
        %v1301 = vpack.c.bf16 %v1297, %v1297
        %v1302 = vpack.c.bf16 %v1298, %v1298
        %v1303 = vpack.c.bf16 %v1299, %v1299
        %v1304 = vld [vmem:[#allocation7] sm:$0xff]
        %v1305 = vld [vmem:[#allocation7 + $0x8] sm:$0xff]
        %v1306 = vld [vmem:[#allocation7 + $0x10] sm:$0xff]
        %v1307 = vld [vmem:[#allocation7 + $0x18] sm:$0xff]
        %v1308 = vld [vmem:[#allocation7 + $0x20] sm:$0xff]
        %v1309 = vld [vmem:[#allocation7 + $0x28] sm:$0xff]
        %v1310 = vld [vmem:[#allocation7 + $0x30] sm:$0xff]
        %v1311 = vld [vmem:[#allocation7 + $0x38] sm:$0xff]
        %v1312 = vld [vmem:[#allocation7 + $0x40] sm:$0xff]
        %v1313 = vld [vmem:[#allocation7 + $0x48] sm:$0xff]
        %v1314 = vld [vmem:[#allocation7 + $0x50] sm:$0xff]
        %v1315 = vld [vmem:[#allocation7 + $0x58] sm:$0xff]
        %v1316 = vld [vmem:[#allocation7 + $0x60] sm:$0xff]
        %v1317 = vld [vmem:[#allocation7 + $0x68] sm:$0xff]
        %v1318 = vld [vmem:[#allocation7 + $0x70] sm:$0xff]
        %v1319 = vld [vmem:[#allocation7 + $0x78] sm:$0xff]
        %v1320 = vld [vmem:[#allocation7 + $0x80] sm:$0xff]
        %v1321 = vld [vmem:[#allocation7 + $0x88] sm:$0xff]
        %v1322 = vld [vmem:[#allocation7 + $0x90] sm:$0xff]
        %v1323 = vld [vmem:[#allocation7 + $0x98] sm:$0xff]
        %v1324 = vld [vmem:[#allocation7 + $0xa0] sm:$0xff]
        %v1325 = vld [vmem:[#allocation7 + $0xa8] sm:$0xff]
        %v1326 = vld [vmem:[#allocation7 + $0xb0] sm:$0xff]
        %v1327 = vld [vmem:[#allocation7 + $0xb8] sm:$0xff]
        %v1328 = vld [vmem:[#allocation7 + $0xc0] sm:$0xff]
        %v1329 = vld [vmem:[#allocation7 + $0xc8] sm:$0xff]
        %v1330 = vld [vmem:[#allocation7 + $0xd0] sm:$0xff]
        %v1331 = vld [vmem:[#allocation7 + $0xd8] sm:$0xff]
        %v1332 = vld [vmem:[#allocation7 + $0xe0] sm:$0xff]
        %v1333 = vld [vmem:[#allocation7 + $0xe8] sm:$0xff]
        %v1334 = vld [vmem:[#allocation7 + $0xf0] sm:$0xff]
        %v1335 = vld [vmem:[#allocation7 + $0xf8] sm:$0xff]
        %v1336 = vld [vmem:[#allocation7 + $0x100] sm:$0xff]
        %v1337 = vld [vmem:[#allocation7 + $0x108] sm:$0xff]
        %v1338 = vld [vmem:[#allocation7 + $0x110] sm:$0xff]
        %v1339 = vld [vmem:[#allocation7 + $0x118] sm:$0xff]
        %v1340 = vld [vmem:[#allocation7 + $0x120] sm:$0xff]
        %v1341 = vld [vmem:[#allocation7 + $0x128] sm:$0xff]
        %v1342 = vld [vmem:[#allocation7 + $0x130] sm:$0xff]
        %v1343 = vld [vmem:[#allocation7 + $0x138] sm:$0xff]
        %v1344 = vld [vmem:[#allocation7 + $0x140] sm:$0xff]
        %v1345 = vld [vmem:[#allocation7 + $0x148] sm:$0xff]
        %v1346 = vld [vmem:[#allocation7 + $0x150] sm:$0xff]
        %v1347 = vld [vmem:[#allocation7 + $0x158] sm:$0xff]
        %v1348 = vld [vmem:[#allocation7 + $0x160] sm:$0xff]
        %v1349 = vld [vmem:[#allocation7 + $0x168] sm:$0xff]
        %v1350 = vld [vmem:[#allocation7 + $0x170] sm:$0xff]
        %v1351 = vld [vmem:[#allocation7 + $0x178] sm:$0xff]
        %v1352 = vld [vmem:[#allocation7 + $0x180] sm:$0xff]
        %v1353 = vld [vmem:[#allocation7 + $0x188] sm:$0xff]
        %v1354 = vld [vmem:[#allocation7 + $0x190] sm:$0xff]
        %v1355 = vld [vmem:[#allocation7 + $0x198] sm:$0xff]
        %v1356 = vld [vmem:[#allocation7 + $0x1a0] sm:$0xff]
        %v1357 = vld [vmem:[#allocation7 + $0x1a8] sm:$0xff]
        %v1358 = vld [vmem:[#allocation7 + $0x1b0] sm:$0xff]
        %v1359 = vld [vmem:[#allocation7 + $0x1b8] sm:$0xff]
        %v1360 = vld [vmem:[#allocation7 + $0x1c0] sm:$0xff]
        %v1361 = vld [vmem:[#allocation7 + $0x1c8] sm:$0xff]
        %v1362 = vld [vmem:[#allocation7 + $0x1d0] sm:$0xff]
        %v1363 = vld [vmem:[#allocation7 + $0x1d8] sm:$0xff]
        %v1364 = vld [vmem:[#allocation7 + $0x1e0] sm:$0xff]
        %v1365 = vld [vmem:[#allocation7 + $0x1e8] sm:$0xff]
        %v1366 = vld [vmem:[#allocation7 + $0x1f0] sm:$0xff]
        %v1367 = vld [vmem:[#allocation7 + $0x1f8] sm:$0xff]
        %v1368 = vld [vmem:[%s4] sm:$0x3]
        %v1370 = vlaneseq
        %v1371 = vshrl.u32 %v1370, 7
        %v1372 = vsub.s32 0, %v1371
        %v1373 = vrot.slane %v1368, %v1372
        %v1374 = vlaneseq
        %v1375 = vshrl.u32 %v1374, 7
        %v1376 = vsub.s32 1, %v1375
        %v1377 = vrot.slane %v1368, %v1376
        %v1444 = vunpack.c.l.b16 %v1304
        %v1445 = vunpack.c.h.b16 %v1304
        %v1446 = vunpack.c.l.b16 %v1305
        %v1447 = vunpack.c.h.b16 %v1305
        %v1448 = vunpack.c.l.b16 %v1306
        %v1449 = vunpack.c.h.b16 %v1306
        %v1450 = vunpack.c.l.b16 %v1307
        %v1451 = vunpack.c.h.b16 %v1307
        %v1452 = vunpack.c.l.b16 %v1308
        %v1453 = vunpack.c.h.b16 %v1308
        %v1454 = vunpack.c.l.b16 %v1309
        %v1455 = vunpack.c.h.b16 %v1309
        %v1456 = vunpack.c.l.b16 %v1310
        %v1457 = vunpack.c.h.b16 %v1310
        %v1458 = vunpack.c.l.b16 %v1311
        %v1459 = vunpack.c.h.b16 %v1311
        %v1460 = vunpack.c.l.b16 %v1312
        %v1461 = vunpack.c.h.b16 %v1312
        %v1462 = vunpack.c.l.b16 %v1313
        %v1463 = vunpack.c.h.b16 %v1313
        %v1464 = vunpack.c.l.b16 %v1314
        %v1465 = vunpack.c.h.b16 %v1314
        %v1466 = vunpack.c.l.b16 %v1315
        %v1467 = vunpack.c.h.b16 %v1315
        %v1468 = vunpack.c.l.b16 %v1316
        %v1469 = vunpack.c.h.b16 %v1316
        %v1470 = vunpack.c.l.b16 %v1317
        %v1471 = vunpack.c.h.b16 %v1317
        %v1472 = vunpack.c.l.b16 %v1318
        %v1473 = vunpack.c.h.b16 %v1318
        %v1474 = vunpack.c.l.b16 %v1319
        %v1475 = vunpack.c.h.b16 %v1319
        %v1476 = vunpack.c.l.b16 %v1320
        %v1477 = vunpack.c.h.b16 %v1320
        %v1478 = vunpack.c.l.b16 %v1321
        %v1479 = vunpack.c.h.b16 %v1321
        %v1480 = vunpack.c.l.b16 %v1322
        %v1481 = vunpack.c.h.b16 %v1322
        %v1482 = vunpack.c.l.b16 %v1323
        %v1483 = vunpack.c.h.b16 %v1323
        %v1484 = vunpack.c.l.b16 %v1324
        %v1485 = vunpack.c.h.b16 %v1324
        %v1486 = vunpack.c.l.b16 %v1325
        %v1487 = vunpack.c.h.b16 %v1325
        %v1488 = vunpack.c.l.b16 %v1326
        %v1489 = vunpack.c.h.b16 %v1326
        %v1490 = vunpack.c.l.b16 %v1327
        %v1491 = vunpack.c.h.b16 %v1327
        %v1492 = vunpack.c.l.b16 %v1328
        %v1493 = vunpack.c.h.b16 %v1328
        %v1494 = vunpack.c.l.b16 %v1329
        %v1495 = vunpack.c.h.b16 %v1329
        %v1496 = vunpack.c.l.b16 %v1330
        %v1497 = vunpack.c.h.b16 %v1330
        %v1498 = vunpack.c.l.b16 %v1331
        %v1499 = vunpack.c.h.b16 %v1331
        %v1500 = vunpack.c.l.b16 %v1332
        %v1501 = vunpack.c.h.b16 %v1332
        %v1502 = vunpack.c.l.b16 %v1333
        %v1503 = vunpack.c.h.b16 %v1333
        %v1504 = vunpack.c.l.b16 %v1334
        %v1505 = vunpack.c.h.b16 %v1334
        %v1506 = vunpack.c.l.b16 %v1335
        %v1507 = vunpack.c.h.b16 %v1335
        %v1508 = vunpack.c.l.b16 %v1336
        %v1509 = vunpack.c.h.b16 %v1336
        %v1510 = vunpack.c.l.b16 %v1337
        %v1511 = vunpack.c.h.b16 %v1337
        %v1512 = vunpack.c.l.b16 %v1338
        %v1513 = vunpack.c.h.b16 %v1338
        %v1514 = vunpack.c.l.b16 %v1339
        %v1515 = vunpack.c.h.b16 %v1339
        %v1516 = vunpack.c.l.b16 %v1340
        %v1517 = vunpack.c.h.b16 %v1340
        %v1518 = vunpack.c.l.b16 %v1341
        %v1519 = vunpack.c.h.b16 %v1341
        %v1520 = vunpack.c.l.b16 %v1342
        %v1521 = vunpack.c.h.b16 %v1342
        %v1522 = vunpack.c.l.b16 %v1343
        %v1523 = vunpack.c.h.b16 %v1343
        %v1524 = vunpack.c.l.b16 %v1344
        %v1525 = vunpack.c.h.b16 %v1344
        %v1526 = vunpack.c.l.b16 %v1345
        %v1527 = vunpack.c.h.b16 %v1345
        %v1528 = vunpack.c.l.b16 %v1346
        %v1529 = vunpack.c.h.b16 %v1346
        %v1530 = vunpack.c.l.b16 %v1347
        %v1531 = vunpack.c.h.b16 %v1347
        %v1532 = vunpack.c.l.b16 %v1348
        %v1533 = vunpack.c.h.b16 %v1348
        %v1534 = vunpack.c.l.b16 %v1349
        %v1535 = vunpack.c.h.b16 %v1349
        %v1536 = vunpack.c.l.b16 %v1350
        %v1537 = vunpack.c.h.b16 %v1350
        %v1538 = vunpack.c.l.b16 %v1351
        %v1539 = vunpack.c.h.b16 %v1351
        %v1540 = vunpack.c.l.b16 %v1352
        %v1541 = vunpack.c.h.b16 %v1352
        %v1542 = vunpack.c.l.b16 %v1353
        %v1543 = vunpack.c.h.b16 %v1353
        %v1544 = vunpack.c.l.b16 %v1354
        %v1545 = vunpack.c.h.b16 %v1354
        %v1546 = vunpack.c.l.b16 %v1355
        %v1547 = vunpack.c.h.b16 %v1355
        %v1548 = vunpack.c.l.b16 %v1356
        %v1549 = vunpack.c.h.b16 %v1356
        %v1550 = vunpack.c.l.b16 %v1357
        %v1551 = vunpack.c.h.b16 %v1357
        %v1552 = vunpack.c.l.b16 %v1358
        %v1553 = vunpack.c.h.b16 %v1358
        %v1554 = vunpack.c.l.b16 %v1359
        %v1555 = vunpack.c.h.b16 %v1359
        %v1556 = vunpack.c.l.b16 %v1360
        %v1557 = vunpack.c.h.b16 %v1360
        %v1558 = vunpack.c.l.b16 %v1361
        %v1559 = vunpack.c.h.b16 %v1361
        %v1560 = vunpack.c.l.b16 %v1362
        %v1561 = vunpack.c.h.b16 %v1362
        %v1562 = vunpack.c.l.b16 %v1363
        %v1563 = vunpack.c.h.b16 %v1363
        %v1564 = vunpack.c.l.b16 %v1364
        %v1565 = vunpack.c.h.b16 %v1364
        %v1566 = vunpack.c.l.b16 %v1365
        %v1567 = vunpack.c.h.b16 %v1365
        %v1568 = vunpack.c.l.b16 %v1366
        %v1569 = vunpack.c.h.b16 %v1366
        %v1570 = vunpack.c.l.b16 %v1367
        %v1571 = vunpack.c.h.b16 %v1367
        %v1572 = vpack.c.b16 %v1446, %v1444
        %v1573 = vpack.c.b16 %v1447, %v1445
        %v1574 = vpack.c.b16 %v1450, %v1448
        %v1575 = vpack.c.b16 %v1451, %v1449
        %v1576 = vpack.c.b16 %v1454, %v1452
        %v1577 = vpack.c.b16 %v1455, %v1453
        %v1578 = vpack.c.b16 %v1458, %v1456
        %v1579 = vpack.c.b16 %v1459, %v1457
        %v1580 = vpack.c.b16 %v1462, %v1460
        %v1581 = vpack.c.b16 %v1463, %v1461
        %v1582 = vpack.c.b16 %v1466, %v1464
        %v1583 = vpack.c.b16 %v1467, %v1465
        %v1584 = vpack.c.b16 %v1470, %v1468
        %v1585 = vpack.c.b16 %v1471, %v1469
        %v1586 = vpack.c.b16 %v1474, %v1472
        %v1587 = vpack.c.b16 %v1475, %v1473
        %v1588 = vpack.c.b16 %v1478, %v1476
        %v1589 = vpack.c.b16 %v1479, %v1477
        %v1590 = vpack.c.b16 %v1482, %v1480
        %v1591 = vpack.c.b16 %v1483, %v1481
        %v1592 = vpack.c.b16 %v1486, %v1484
        %v1593 = vpack.c.b16 %v1487, %v1485
        %v1594 = vpack.c.b16 %v1490, %v1488
        %v1595 = vpack.c.b16 %v1491, %v1489
        %v1596 = vpack.c.b16 %v1494, %v1492
        %v1597 = vpack.c.b16 %v1495, %v1493
        %v1598 = vpack.c.b16 %v1498, %v1496
        %v1599 = vpack.c.b16 %v1499, %v1497
        %v1600 = vpack.c.b16 %v1502, %v1500
        %v1601 = vpack.c.b16 %v1503, %v1501
        %v1602 = vpack.c.b16 %v1506, %v1504
        %v1603 = vpack.c.b16 %v1507, %v1505
        %v1604 = vpack.c.b16 %v1510, %v1508
        %v1605 = vpack.c.b16 %v1511, %v1509
        %v1606 = vpack.c.b16 %v1514, %v1512
        %v1607 = vpack.c.b16 %v1515, %v1513
        %v1608 = vpack.c.b16 %v1518, %v1516
        %v1609 = vpack.c.b16 %v1519, %v1517
        %v1610 = vpack.c.b16 %v1522, %v1520
        %v1611 = vpack.c.b16 %v1523, %v1521
        %v1612 = vpack.c.b16 %v1526, %v1524
        %v1613 = vpack.c.b16 %v1527, %v1525
        %v1614 = vpack.c.b16 %v1530, %v1528
        %v1615 = vpack.c.b16 %v1531, %v1529
        %v1616 = vpack.c.b16 %v1534, %v1532
        %v1617 = vpack.c.b16 %v1535, %v1533
        %v1618 = vpack.c.b16 %v1538, %v1536
        %v1619 = vpack.c.b16 %v1539, %v1537
        %v1620 = vpack.c.b16 %v1542, %v1540
        %v1621 = vpack.c.b16 %v1543, %v1541
        %v1622 = vpack.c.b16 %v1546, %v1544
        %v1623 = vpack.c.b16 %v1547, %v1545
        %v1624 = vpack.c.b16 %v1550, %v1548
        %v1625 = vpack.c.b16 %v1551, %v1549
        %v1626 = vpack.c.b16 %v1554, %v1552
        %v1627 = vpack.c.b16 %v1555, %v1553
        %v1628 = vpack.c.b16 %v1558, %v1556
        %v1629 = vpack.c.b16 %v1559, %v1557
        %v1630 = vpack.c.b16 %v1562, %v1560
        %v1631 = vpack.c.b16 %v1563, %v1561
        %v1632 = vpack.c.b16 %v1566, %v1564
        %v1633 = vpack.c.b16 %v1567, %v1565
        %v1634 = vpack.c.b16 %v1570, %v1568
        %v1635 = vpack.c.b16 %v1571, %v1569
        %1700 = vmatprep.subr.bf16.mxu0 %v1573
        %1701 = vmatpush1.bf16.msra.mxu0 %v1572
        %1702 = vmatprep.subr.bf16.mxu0 %v1575
        %1703 = vmatpush1.bf16.msra.mxu0 %v1574
        %1704 = vmatprep.subr.bf16.mxu0 %v1577
        %1705 = vmatpush1.bf16.msra.mxu0 %v1576
        %1706 = vmatprep.subr.bf16.mxu0 %v1579
        %1707 = vmatpush1.bf16.msra.mxu0 %v1578
        %1708 = vmatprep.subr.bf16.mxu0 %v1581
        %1709 = vmatpush1.bf16.msra.mxu0 %v1580
        %1710 = vmatprep.subr.bf16.mxu0 %v1583
        %1711 = vmatpush1.bf16.msra.mxu0 %v1582
        %1712 = vmatprep.subr.bf16.mxu0 %v1585
        %1713 = vmatpush1.bf16.msra.mxu0 %v1584
        %1714 = vmatprep.subr.bf16.mxu0 %v1587
        %1715 = vmatpush1.bf16.msra.mxu0 %v1586
        %1716 = vmatprep.subr.bf16.mxu0 %v1589
        %1717 = vmatpush1.bf16.msra.mxu0 %v1588
        %1718 = vmatprep.subr.bf16.mxu0 %v1591
        %1719 = vmatpush1.bf16.msra.mxu0 %v1590
        %1720 = vmatprep.subr.bf16.mxu0 %v1593
        %1721 = vmatpush1.bf16.msra.mxu0 %v1592
        %1722 = vmatprep.subr.bf16.mxu0 %v1595
        %1723 = vmatpush1.bf16.msra.mxu0 %v1594
        %1724 = vmatprep.subr.bf16.mxu0 %v1597
        %1725 = vmatpush1.bf16.msra.mxu0 %v1596
        %1726 = vmatprep.subr.bf16.mxu0 %v1599
        %1727 = vmatpush1.bf16.msra.mxu0 %v1598
        %1728 = vmatprep.subr.bf16.mxu0 %v1601
        %1729 = vmatpush1.bf16.msra.mxu0 %v1600
        %1730 = vmatprep.subr.bf16.mxu0 %v1603
        %1731 = vmatpush1.bf16.msra.mxu0 %v1602
        %1732 = vmatprep.mubr.bf16.mxu0 %v1301
        %1733 = vmatmul.mubr.bf16.gmra.mrb[0].mxu0 %v1300
        %v1734 = vpop.f32.mrb[0].mxu0
        %v1735 = vadd.f32 %v1373, %v1734
        %v1736 = vpop.f32.mrb[0].mxu0
        %v1737 = vadd.f32 %v1377, %v1736
        %v1738 = vpop.f32.mrb[0].mxu0
        %v1739 = vpop.f32.mrb[0].mxu0
        %1740 = vdwg.mxu0
        %1741 = vmatprep.subr.bf16.mxu0 %v1605
        %1742 = vmatpush1.bf16.msra.mxu0 %v1604
        %1743 = vmatprep.subr.bf16.mxu0 %v1607
        %1744 = vmatpush1.bf16.msra.mxu0 %v1606
        %1745 = vmatprep.subr.bf16.mxu0 %v1609
        %1746 = vmatpush1.bf16.msra.mxu0 %v1608
        %1747 = vmatprep.subr.bf16.mxu0 %v1611
        %1748 = vmatpush1.bf16.msra.mxu0 %v1610
        %1749 = vmatprep.subr.bf16.mxu0 %v1613
        %1750 = vmatpush1.bf16.msra.mxu0 %v1612
        %1751 = vmatprep.subr.bf16.mxu0 %v1615
        %1752 = vmatpush1.bf16.msra.mxu0 %v1614
        %1753 = vmatprep.subr.bf16.mxu0 %v1617
        %1754 = vmatpush1.bf16.msra.mxu0 %v1616
        %1755 = vmatprep.subr.bf16.mxu0 %v1619
        %1756 = vmatpush1.bf16.msra.mxu0 %v1618
        %1757 = vmatprep.subr.bf16.mxu0 %v1621
        %1758 = vmatpush1.bf16.msra.mxu0 %v1620
        %1759 = vmatprep.subr.bf16.mxu0 %v1623
        %1760 = vmatpush1.bf16.msra.mxu0 %v1622
        %1761 = vmatprep.subr.bf16.mxu0 %v1625
        %1762 = vmatpush1.bf16.msra.mxu0 %v1624
        %1763 = vmatprep.subr.bf16.mxu0 %v1627
        %1764 = vmatpush1.bf16.msra.mxu0 %v1626
        %1765 = vmatprep.subr.bf16.mxu0 %v1629
        %1766 = vmatpush1.bf16.msra.mxu0 %v1628
        %1767 = vmatprep.subr.bf16.mxu0 %v1631
        %1768 = vmatpush1.bf16.msra.mxu0 %v1630
        %1769 = vmatprep.subr.bf16.mxu0 %v1633
        %1770 = vmatpush1.bf16.msra.mxu0 %v1632
        %1771 = vmatprep.subr.bf16.mxu0 %v1635
        %1772 = vmatpush1.bf16.msra.mxu0 %v1634
        %1773 = vmatprep.mubr.bf16.mxu0 %v1303
        %1774 = vmatmul.mubr.bf16.gmra.mrb[0].mxu0 %v1302
        %v1775 = vpop.f32.mrb[0].mxu0
        %v1776 = vadd.f32 %v1735, %v1775
        %v1777 = vpop.f32.mrb[0].mxu0
        %v1778 = vadd.f32 %v1737, %v1777
        %v1779 = vpop.f32.mrb[0].mxu0
        %v1780 = vpop.f32.mrb[0].mxu0
        %1781 = vdwg.mxu0
        %vm1782 = vcmp.gt.f32.partialorder %v1776, 0.0
        %vm1783 = vcmp.gt.f32.partialorder %v1778, 0.0
        %v1784 = vmul.f32 %v1776, 0.2
        %v1785 = vmul.f32 %v1778, 0.2
        %v1786 = vsel %vm1782, %v1776, %v1784
        %v1787 = vsel %vm1783, %v1778, %v1785
        %v1788 = vld [vmem:[%s5] sm:$0x3]
        %v1790 = vlaneseq
        %v1791 = vshrl.u32 %v1790, 7
        %v1792 = vsub.s32 0, %v1791
        %v1793 = vrot.slane %v1788, %v1792
        %v1794 = vlaneseq
        %v1795 = vshrl.u32 %v1794, 7
        %v1796 = vsub.s32 1, %v1795
        %v1797 = vrot.slane %v1788, %v1796
        %v1800 = vmul.f32 %v1786, %v1793
        %v1801 = vmul.f32 %v1787, %v1797
        %v1802 = vadd.f32 %v1800, %v1801
        %1803 = vadd.xlane.f32.xlu0 %v1802
        %v1804 = vpop.xlane.xlu0 %1803
        %v1805 = vld [vmem:[#allocation2] sm:$0x1]
        %v1807 = vlaneseq
        %v1808 = vshrl.u32 %v1807, 7
        %v1809 = vsub.s32 0, %v1808
        %v1810 = vrot.slane %v1805, %v1809
        %v1812 = vadd.f32 %v1804, %v1810
        %v1813 = vsub.f32 0.0, %v1812
        %v1814 = vmul.f32 %v1813, 1.442695
        %v1815 = vpow.pop %v1814
        %v1816 = vadd.f32 %v1815, 1.0
        %v1817 = vrcp.pop %v1816
        %vm1818 = vcmask 7168
        %1819 = vst.msk [vmem:[%s325] sm:$0xff] %vm1818, %v1817
        %p1820 = scmp.lt.s32.totalorder %s24, 1
        %s1821 = scalar_select %p1820, %s24, 1
        %s1822 = smul.addr %s1821, 8
        %s1823 = scalar_lea.vmem %s7, %s1822
        // Predicated region
        $region61: #{tpu_custom_call.1} parent=47 // pred_check
          %p1824 = pneg %p194
        $region62: #{tpu_custom_call.1} parent=47 // pred_check_branch
          %1826 = sbr.rel (%p1824) target = $region64
        $region63: #{tpu_custom_call.1} parent=47 // pred_region
          _
        $region64: #{tpu_custom_call.1} parent=47 // pred_fallthru
          _
      $region48: #{tpu_custom_call.1} parent=5 // pred_fallthru
        _
      %p1827 = scmp.le.s32.totalorder 2, %s19
      // Predicated region
      $region65: #{tpu_custom_call.1} parent=5 // pred_check
        %p1828 = pneg %p1827
      $region66: #{tpu_custom_call.1} parent=5 // pred_check_branch
        %1830 = sbr.rel (%p1828) target = $region68
      $region67: #{tpu_custom_call.1} parent=5 // pred_region
        %s1831 = ssub.s32 %s19, 2
        // Predicated region
        $region69: #{tpu_custom_call.1} parent=67 // pred_check
          %p1832 = pneg %p200
        $region70: #{tpu_custom_call.1} parent=67 // pred_check_branch
          %1834 = sbr.rel (%p1832) target = $region72
        $region71: #{tpu_custom_call.1} parent=67 // pred_region
          %p1835 = scmp.lt.s32.totalorder %s25, 1
          %s1836 = scalar_select %p1835, %s25, 1
          %s1837 = smul.addr %s1836, 8
          %s1838 = scalar_lea.vmem %s7, %s1837
        $region72: #{tpu_custom_call.1} parent=67 // pred_fallthru
          _
      $region68: #{tpu_custom_call.1} parent=5 // pred_fallthru
        _
    $region6: #{tpu_custom_call.1} parent=1 // loop_footer
      %s23 = sadd.s32 1, %s19
    $region7: #{tpu_custom_call.1} parent=1 // loop_footer_branch
      %18 = sbr.rel target = $region3
    $region8: #{tpu_custom_call.1} parent=1 // loop_exit
      _
    %1839 = vsyncpa [#allocation4], 1
    %s1840 = scalar_lea.sflag [#allocation4], 1
    %1841 = vsyncpa %s1840, 1
    %1842 = vsyncpa [#allocation6], 1

</llo_original>
